<compile_context>
chip_gen: v7x
topology: tpu7x:2x2x1
jax: 0.10.0
libtpu: 0.0.40
codegen_flags: <defaults>
</compile_context>

<pallas_src>
import jax
import jax.numpy as jnp
from jax.experimental import pallas as pl
from jax.experimental.pallas import tpu as pltpu


def _pool_linear_kernel(x_ref, w_ref, b_ref, o_ref):
    """Fused global-average-pool + Linear head for one batch tile.

      x_ref : [tb, HW, C]   feature-map tile (C lane-dense)
      w_ref : [C, NCp]      out.weight^T, classes zero-padded to NCp
      b_ref : [1, NCp]      out.bias (f32, zero-padded)
      o_ref : [tb, NCp]     logits (f32)
    """
    hw = x_ref.shape[1]
    # Spatial sum over the sublane axis, accumulated in f32 (correct even for
    # bf16 feature maps).  The /HW of the mean commutes with the linear layer
    # and is applied to the (much smaller) matmul result.
    pooled = jnp.sum(x_ref[...].astype(jnp.float32), axis=1)          # [tb, C]
    acc = jnp.dot(pooled.astype(w_ref.dtype), w_ref[...],
                  preferred_element_type=jnp.float32)                 # [tb, NCp]
    o_ref[...] = (acc * jnp.float32(1.0 / hw) + b_ref[...]).astype(o_ref.dtype)


def classification_head(feats_nchw, weight, bias, *, batch_tile=None):
    """feats_nchw: [B, C, H, W]; weight: [num_classes, C]; bias: [num_classes].

    Returns f32 logits [B, num_classes], matching
        torch.flatten(avgpool(feats), 1) @ weight.T + bias
    """
    B, C, H, W = feats_nchw.shape
    HW = H * W
    NC = weight.shape[0]
    NCp = ((NC + 127) // 128) * 128            # lane-dense matmul-N / output

    # Glue-only layout plumbing (no compute): C onto the lane axis, classes
    # zero-padded.  (A JAX/Flax trunk emitting NHWC would make the transpose
    # a free reshape.)
    x = feats_nchw.reshape(B, C, HW).transpose(0, 2, 1)               # [B, HW, C]
    w_t = jnp.zeros((C, NCp), weight.dtype).at[:, :NC].set(weight.T)  # [C, NCp]
    b2 = jnp.zeros((1, NCp), jnp.float32).at[:, :NC].set(
        bias.astype(jnp.float32))

    # Batch tiling: one parallel grid axis; each step owns a disjoint output
    # block.  tb*HW*C*itemsize stays well under the 32 MiB scoped-VMEM default
    # even double-buffered (<= ~6.5 MiB per bf16 tile at ResNet50 shapes), so
    # the same tile sizes are safe on v5e/v6e (128 MiB) and v7x (64 MiB).
    if batch_tile is None:
        batch_tile = next((t for t in (32, 16, 8) if B % t == 0), B)
    tb = batch_tile
    assert B % tb == 0, "batch must tile evenly"

    out = pl.pallas_call(
        _pool_linear_kernel,
        out_shape=jax.ShapeDtypeStruct((B, NCp), jnp.float32),
        grid_spec=pltpu.PrefetchScalarGridSpec(
            num_scalar_prefetch=0,
            grid=(B // tb,),
            in_specs=[
                pl.BlockSpec((tb, HW, C), lambda i: (i, 0, 0)),
                pl.BlockSpec((C, NCp), lambda i: (0, 0)),
                pl.BlockSpec((1, NCp), lambda i: (0, 0)),
            ],
            out_specs=pl.BlockSpec((tb, NCp), lambda i: (i, 0)),
        ),
        compiler_params=pltpu.CompilerParams(
            dimension_semantics=("parallel",)),
    )(x, w_t, b2)
    return out[:, :NC]


if __name__ == "__main__":
    # Small deterministic example consistent with the module:
    #   Linear(2048, num_classes) head -> C = 2048 (fixed by __init__),
    #   batch = 2, spatial 4x4 (stand-in for the trunk's layer4 output),
    #   num_classes = 8.  Feature map / weights in bf16 (HBM-bound kernel).
    B, C, H, W = 2, 2048, 4, 4
    NUM_CLASSES = 8

    key = jax.random.PRNGKey(0)
    k_feat, k_w, k_b = jax.random.split(key, 3)

    feats = jax.random.normal(k_feat, (B, C, H, W), jnp.float32).astype(jnp.bfloat16)
    # nn.Linear(2048, num_classes): weight [num_classes, 2048], bias [num_classes]
    weight = (jax.random.normal(k_w, (NUM_CLASSES, C), jnp.float32) * 0.02
              ).astype(jnp.bfloat16)
    bias = jax.random.normal(k_b, (NUM_CLASSES,), jnp.float32) * 0.02

    logits = classification_head(feats, weight, bias)
    logits = jax.block_until_ready(logits)

    # Pure-JAX f32 reference of the implemented forward-path tail.
    ref = (feats.astype(jnp.float32).mean(axis=(2, 3))
           @ weight.astype(jnp.float32).T + bias)
    assert logits.shape == (B, NUM_CLASSES)
    assert jnp.allclose(logits, ref, atol=2e-2, rtol=2e-2), "mismatch vs reference"

    print("KERNEL_OK")
</pallas_src>

<mosaic_0001>
module attributes {stable_mosaic.version = 11 : i64} {
  func.func @_pool_linear_kernel(%arg0: i32, %arg1: memref<2x16x2048xbf16, #tpu.memory_space<vmem>>, %arg2: memref<2048x128xbf16, #tpu.memory_space<vmem>>, %arg3: memref<1x128xf32, #tpu.memory_space<vmem>>, %arg4: memref<2x128xf32, #tpu.memory_space<vmem>>) attributes {dimension_semantics = [#tpu.dimension_semantics<parallel>], iteration_bounds = array<i64: 1>, scalar_prefetch = 0 : i64, scratch_operands = 0 : i64, tpu.core_type = #tpu.core_type<tc>, window_params = [{transform_indices = @transform_0, window_bounds = array<i64: 2, 16, 2048>}, {pipeline_mode = #tpu.pipeline_mode<synchronous>, transform_indices = @transform_1, window_bounds = array<i64: 2048, 128>}, {pipeline_mode = #tpu.pipeline_mode<synchronous>, transform_indices = @transform_2, window_bounds = array<i64: 1, 128>}, {transform_indices = @transform_3, window_bounds = array<i64: 2, 128>}]} {
    %c0 = arith.constant 0 : index
    %c0_0 = arith.constant 0 : index
    %c0_1 = arith.constant 0 : index
    %0 = vector.load %arg1[%c0, %c0_0, %c0_1] : memref<2x16x2048xbf16, #tpu.memory_space<vmem>>, vector<2x16x2048xbf16>
    %1 = arith.extf %0 : vector<2x16x2048xbf16> to vector<2x16x2048xf32>
    %cst = arith.constant dense<0.000000e+00> : vector<2x2048xf32>
    %2 = vector.multi_reduction <add>, %1, %cst [1] : vector<2x16x2048xf32> to vector<2x2048xf32>
    %3 = arith.truncf %2 : vector<2x2048xf32> to vector<2x2048xbf16>
    %c0_2 = arith.constant 0 : index
    %c0_3 = arith.constant 0 : index
    %4 = vector.load %arg2[%c0_2, %c0_3] : memref<2048x128xbf16, #tpu.memory_space<vmem>>, vector<2048x128xbf16>
    %cst_4 = arith.constant dense<0.000000e+00> : vector<2x128xf32>
    %5 = tpu.matmul %3, %4, %cst_4 {dimension_numbers = #tpu.dot_dimension_numbers<[1], [0], [0], [1], [0, 0, 1, 1], [], []>} : vector<2x2048xbf16>, vector<2048x128xbf16>, vector<2x128xf32> -> vector<2x128xf32>
    %cst_5 = arith.constant 6.250000e-02 : f32
    %6 = vector.broadcast %cst_5 : f32 to vector<2x128xf32>
    %7 = arith.mulf %5, %6 : vector<2x128xf32>
    %c0_6 = arith.constant 0 : index
    %c0_7 = arith.constant 0 : index
    %8 = vector.load %arg3[%c0_6, %c0_7] : memref<1x128xf32, #tpu.memory_space<vmem>>, vector<1x128xf32>
    %9 = vector.broadcast %8 : vector<1x128xf32> to vector<2x128xf32>
    %10 = arith.addf %7, %9 : vector<2x128xf32>
    %c0_8 = arith.constant 0 : index
    %c0_9 = arith.constant 0 : index
    %11 = vector.load %arg4[%c0_8, %c0_9] : memref<2x128xf32, #tpu.memory_space<vmem>>, vector<2x128xf32>
    tpu.vector_store %arg4[%c0_8, %c0_9], %10 {strides = array<i32>} : memref<2x128xf32, #tpu.memory_space<vmem>>, vector<2x128xf32>,
    return
  }
  func.func @transform_0(%arg0: i32) -> (i32, i32, i32) {
    %c0_i32 = arith.constant 0 : i32
    %c0_i32_0 = arith.constant 0 : i32
    %c0_i32_1 = arith.constant 0 : i32
    return %arg0, %c0_i32, %c0_i32_0 : i32, i32, i32
  }
  func.func @transform_1(%arg0: i32) -> (i32, i32) {
    %c0_i32 = arith.constant 0 : i32
    %c0_i32_0 = arith.constant 0 : i32
    %c0_i32_1 = arith.constant 0 : i32
    return %c0_i32, %c0_i32_0 : i32, i32
  }
  func.func @transform_2(%arg0: i32) -> (i32, i32) {
    %c0_i32 = arith.constant 0 : i32
    %c0_i32_0 = arith.constant 0 : i32
    %c0_i32_1 = arith.constant 0 : i32
    return %c0_i32, %c0_i32_0 : i32, i32
  }
  func.func @transform_3(%arg0: i32) -> (i32, i32) {
    %c0_i32 = arith.constant 0 : i32
    %c0_i32_0 = arith.constant 0 : i32
    return %arg0, %c0_i32 : i32, i32
  }
}

</mosaic_0001>

<llo_original>
// kernel: tpu_custom_call.1
$region0: #{tpu_custom_call.1}
  #allocation0 [shape = 'u32[]', space=smem, size = 0x4, offset = 0x4, fixed_abs, tag = 'smem constant byte address 0x4 - core index']
  #allocation1 [shape = 'u32[144,128]{1,0:T(1,128)}', space=vmem, size = 0x12000, scoped, tag = 'internal scratch']
  %s0 = inlined_call_operand.hbm [shape: bf16[2,16,2048], index: 0, kind: input, shape index: {}]
  %s1 = inlined_call_operand.hbm [shape: bf16[2048,128], index: 1, kind: input, shape index: {}]
  %s2 = inlined_call_operand.vmem [shape: f32[1,128], index: 2, kind: input, shape index: {}]
  %s3 = inlined_call_operand.hbm [shape: f32[2,128], index: 3, kind: output, shape index: {}]
  %s4 = sld [smem:[#allocation0]]
  $region30: #{tpu_custom_call.1} parent=0
    _
  %s6 = ssub.s32 1, %s4
  %s7 = scalar_select 0, %s6, %s4
  $region1: #{tpu_custom_call.1} parent=0
    #allocation2 [shape = 'u8[131072]{0}', space=vmem, size = 0x20000, scoped, tag = 'input window, operand 0, single buffered']
    #allocation3 [shape = 's32[1]{0}', space=sflag, size = 0x4, scoped, tag = 'scoped memory for tpu_custom_call.1']
    #allocation4 [shape = 's32[1]{0}', space=sflag, size = 0x4, scoped, tag = 'scoped memory for tpu_custom_call.1']
    #allocation5 [shape = 'u8[524288]{0}', space=vmem, size = 0x80000, scoped, tag = 'input window, operand 1, single buffered']
    #allocation6 [shape = 's32[1]{0}', space=sflag, size = 0x4, scoped, tag = 'scoped memory for tpu_custom_call.1']
    #allocation7 [shape = 'u8[1024]{0}', space=vmem, size = 0x400, scoped, tag = 'output window, operand 0, single buffered']
    %8 = vsyncpa [#allocation3], 0
    %9 = vsyncpa [#allocation6], 0
    %10 = vsyncpa [#allocation4], 0
    // Predicated region
    $region2: #{tpu_custom_call.1} parent=1 // pred_check
      _
    $region3: #{tpu_custom_call.1} parent=1 // pred_check_branch
      %12 = sbr.rel (0) target = $region5
    $region4: #{tpu_custom_call.1} parent=1 // pred_region
      %s14 = ssub.s32 4096, 4096
      %15 = vsyncadd [#allocation3], %s14
      %s16 = sshll.u32 [#allocation2], 4
      %s17 = int_to_ptr.vmem [resolvable:$true] %s16
      %22 = dma.hbm_to_vmem [thread:$0]  %s0, 4096, %s17, [#allocation3], 1024, 1024, 64
    $region5: #{tpu_custom_call.1} parent=1 // pred_fallthru
      _
    // Predicated region
    $region6: #{tpu_custom_call.1} parent=1 // pred_check
      _
    $region7: #{tpu_custom_call.1} parent=1 // pred_check_branch
      %24 = sbr.rel (0) target = $region9
    $region8: #{tpu_custom_call.1} parent=1 // pred_region
      %s26 = ssub.s32 16384, 16384
      %27 = vsyncadd [#allocation6], %s26
      %s28 = sshll.u32 [#allocation5], 4
      %s29 = int_to_ptr.vmem [resolvable:$true] %s28
      %34 = dma.hbm_to_vmem [thread:$0]  %s1, 16384, %s29, [#allocation6], 64, 64, 4
    $region9: #{tpu_custom_call.1} parent=1 // pred_fallthru
      _
    // Predicated region
    $region10: #{tpu_custom_call.1} parent=1 // pred_check
      _
    $region11: #{tpu_custom_call.1} parent=1 // pred_check_branch
      %36 = sbr.rel (0) target = $region13
    $region12: #{tpu_custom_call.1} parent=1 // pred_region
      _
    $region13: #{tpu_custom_call.1} parent=1 // pred_fallthru
      _
    // Predicated region
    $region14: #{tpu_custom_call.1} parent=1 // pred_check
      _
    $region15: #{tpu_custom_call.1} parent=1 // pred_check_branch
      %38 = sbr.rel (0) target = $region17
    $region16: #{tpu_custom_call.1} parent=1 // pred_region
      %39 = dma.done [#allocation3], 4096
    $region17: #{tpu_custom_call.1} parent=1 // pred_fallthru
      _
    // Predicated region
    $region18: #{tpu_custom_call.1} parent=1 // pred_check
      _
    $region19: #{tpu_custom_call.1} parent=1 // pred_check_branch
      %41 = sbr.rel (0) target = $region21
    $region20: #{tpu_custom_call.1} parent=1 // pred_region
      %42 = dma.done [#allocation6], 16384
    $region21: #{tpu_custom_call.1} parent=1 // pred_fallthru
      _
    %v44 = vld [vmem:[#allocation2] sm:$0xff]
    %v45 = vld [vmem:[#allocation2 + $0x8] sm:$0xff]
    %v46 = vld [vmem:[#allocation2 + $0x10] sm:$0xff]
    %v47 = vld [vmem:[#allocation2 + $0x18] sm:$0xff]
    %v48 = vld [vmem:[#allocation2 + $0x20] sm:$0xff]
    %v49 = vld [vmem:[#allocation2 + $0x28] sm:$0xff]
    %v50 = vld [vmem:[#allocation2 + $0x30] sm:$0xff]
    %v51 = vld [vmem:[#allocation2 + $0x38] sm:$0xff]
    %v52 = vld [vmem:[#allocation2 + $0x40] sm:$0xff]
    %v53 = vld [vmem:[#allocation2 + $0x48] sm:$0xff]
    %v54 = vld [vmem:[#allocation2 + $0x50] sm:$0xff]
    %v55 = vld [vmem:[#allocation2 + $0x58] sm:$0xff]
    %v56 = vld [vmem:[#allocation2 + $0x60] sm:$0xff]
    %v57 = vld [vmem:[#allocation2 + $0x68] sm:$0xff]
    %v58 = vld [vmem:[#allocation2 + $0x70] sm:$0xff]
    %v59 = vld [vmem:[#allocation2 + $0x78] sm:$0xff]
    %v60 = vld [vmem:[#allocation2 + $0x80] sm:$0xff]
    %v61 = vld [vmem:[#allocation2 + $0x88] sm:$0xff]
    %v62 = vld [vmem:[#allocation2 + $0x90] sm:$0xff]
    %v63 = vld [vmem:[#allocation2 + $0x98] sm:$0xff]
    %v64 = vld [vmem:[#allocation2 + $0xa0] sm:$0xff]
    %v65 = vld [vmem:[#allocation2 + $0xa8] sm:$0xff]
    %v66 = vld [vmem:[#allocation2 + $0xb0] sm:$0xff]
    %v67 = vld [vmem:[#allocation2 + $0xb8] sm:$0xff]
    %v68 = vld [vmem:[#allocation2 + $0xc0] sm:$0xff]
    %v69 = vld [vmem:[#allocation2 + $0xc8] sm:$0xff]
    %v70 = vld [vmem:[#allocation2 + $0xd0] sm:$0xff]
    %v71 = vld [vmem:[#allocation2 + $0xd8] sm:$0xff]
    %v72 = vld [vmem:[#allocation2 + $0xe0] sm:$0xff]
    %v73 = vld [vmem:[#allocation2 + $0xe8] sm:$0xff]
    %v74 = vld [vmem:[#allocation2 + $0xf0] sm:$0xff]
    %v75 = vld [vmem:[#allocation2 + $0xf8] sm:$0xff]
    %v76 = vunpack.c.l.bf16 %v44
    %v77 = vunpack.c.h.bf16 %v44
    %v78 = vunpack.c.l.bf16 %v45
    %v79 = vunpack.c.h.bf16 %v45
    %v80 = vunpack.c.l.bf16 %v46
    %v81 = vunpack.c.h.bf16 %v46
    %v82 = vunpack.c.l.bf16 %v47
    %v83 = vunpack.c.h.bf16 %v47
    %v84 = vunpack.c.l.bf16 %v48
    %v85 = vunpack.c.h.bf16 %v48
    %v86 = vunpack.c.l.bf16 %v49
    %v87 = vunpack.c.h.bf16 %v49
    %v88 = vunpack.c.l.bf16 %v50
    %v89 = vunpack.c.h.bf16 %v50
    %v90 = vunpack.c.l.bf16 %v51
    %v91 = vunpack.c.h.bf16 %v51
    %v92 = vunpack.c.l.bf16 %v52
    %v93 = vunpack.c.h.bf16 %v52
    %v94 = vunpack.c.l.bf16 %v53
    %v95 = vunpack.c.h.bf16 %v53
    %v96 = vunpack.c.l.bf16 %v54
    %v97 = vunpack.c.h.bf16 %v54
    %v98 = vunpack.c.l.bf16 %v55
    %v99 = vunpack.c.h.bf16 %v55
    %v100 = vunpack.c.l.bf16 %v56
    %v101 = vunpack.c.h.bf16 %v56
    %v102 = vunpack.c.l.bf16 %v57
    %v103 = vunpack.c.h.bf16 %v57
    %v104 = vunpack.c.l.bf16 %v58
    %v105 = vunpack.c.h.bf16 %v58
    %v106 = vunpack.c.l.bf16 %v59
    %v107 = vunpack.c.h.bf16 %v59
    %v108 = vunpack.c.l.bf16 %v60
    %v109 = vunpack.c.h.bf16 %v60
    %v110 = vunpack.c.l.bf16 %v61
    %v111 = vunpack.c.h.bf16 %v61
    %v112 = vunpack.c.l.bf16 %v62
    %v113 = vunpack.c.h.bf16 %v62
    %v114 = vunpack.c.l.bf16 %v63
    %v115 = vunpack.c.h.bf16 %v63
    %v116 = vunpack.c.l.bf16 %v64
    %v117 = vunpack.c.h.bf16 %v64
    %v118 = vunpack.c.l.bf16 %v65
    %v119 = vunpack.c.h.bf16 %v65
    %v120 = vunpack.c.l.bf16 %v66
    %v121 = vunpack.c.h.bf16 %v66
    %v122 = vunpack.c.l.bf16 %v67
    %v123 = vunpack.c.h.bf16 %v67
    %v124 = vunpack.c.l.bf16 %v68
    %v125 = vunpack.c.h.bf16 %v68
    %v126 = vunpack.c.l.bf16 %v69
    %v127 = vunpack.c.h.bf16 %v69
    %v128 = vunpack.c.l.bf16 %v70
    %v129 = vunpack.c.h.bf16 %v70
    %v130 = vunpack.c.l.bf16 %v71
    %v131 = vunpack.c.h.bf16 %v71
    %v132 = vunpack.c.l.bf16 %v72
    %v133 = vunpack.c.h.bf16 %v72
    %v134 = vunpack.c.l.bf16 %v73
    %v135 = vunpack.c.h.bf16 %v73
    %v136 = vunpack.c.l.bf16 %v74
    %v137 = vunpack.c.h.bf16 %v74
    %v138 = vunpack.c.l.bf16 %v75
    %v139 = vunpack.c.h.bf16 %v75
    %v140 = vadd.f32 %v76, %v92
    %v141 = vrot.slane %v140, 4
    %v142 = vadd.f32 %v140, %v141
    %v143 = vrot.slane %v142, 2
    %v144 = vadd.f32 %v142, %v143
    %v145 = vrot.slane %v144, 1
    %v146 = vadd.f32 %v144, %v145
    %v147 = vadd.f32 %v77, %v93
    %v148 = vrot.slane %v147, 4
    %v149 = vadd.f32 %v147, %v148
    %v150 = vrot.slane %v149, 2
    %v151 = vadd.f32 %v149, %v150
    %v152 = vrot.slane %v151, 1
    %v153 = vadd.f32 %v151, %v152
    %v154 = vadd.f32 %v78, %v94
    %v155 = vrot.slane %v154, 4
    %v156 = vadd.f32 %v154, %v155
    %v157 = vrot.slane %v156, 2
    %v158 = vadd.f32 %v156, %v157
    %v159 = vrot.slane %v158, 1
    %v160 = vadd.f32 %v158, %v159
    %v161 = vadd.f32 %v79, %v95
    %v162 = vrot.slane %v161, 4
    %v163 = vadd.f32 %v161, %v162
    %v164 = vrot.slane %v163, 2
    %v165 = vadd.f32 %v163, %v164
    %v166 = vrot.slane %v165, 1
    %v167 = vadd.f32 %v165, %v166
    %v168 = vadd.f32 %v80, %v96
    %v169 = vrot.slane %v168, 4
    %v170 = vadd.f32 %v168, %v169
    %v171 = vrot.slane %v170, 2
    %v172 = vadd.f32 %v170, %v171
    %v173 = vrot.slane %v172, 1
    %v174 = vadd.f32 %v172, %v173
    %v175 = vadd.f32 %v81, %v97
    %v176 = vrot.slane %v175, 4
    %v177 = vadd.f32 %v175, %v176
    %v178 = vrot.slane %v177, 2
    %v179 = vadd.f32 %v177, %v178
    %v180 = vrot.slane %v179, 1
    %v181 = vadd.f32 %v179, %v180
    %v182 = vadd.f32 %v82, %v98
    %v183 = vrot.slane %v182, 4
    %v184 = vadd.f32 %v182, %v183
    %v185 = vrot.slane %v184, 2
    %v186 = vadd.f32 %v184, %v185
    %v187 = vrot.slane %v186, 1
    %v188 = vadd.f32 %v186, %v187
    %v189 = vadd.f32 %v83, %v99
    %v190 = vrot.slane %v189, 4
    %v191 = vadd.f32 %v189, %v190
    %v192 = vrot.slane %v191, 2
    %v193 = vadd.f32 %v191, %v192
    %v194 = vrot.slane %v193, 1
    %v195 = vadd.f32 %v193, %v194
    %v196 = vadd.f32 %v84, %v100
    %v197 = vrot.slane %v196, 4
    %v198 = vadd.f32 %v196, %v197
    %v199 = vrot.slane %v198, 2
    %v200 = vadd.f32 %v198, %v199
    %v201 = vrot.slane %v200, 1
    %v202 = vadd.f32 %v200, %v201
    %v203 = vadd.f32 %v85, %v101
    %v204 = vrot.slane %v203, 4
    %v205 = vadd.f32 %v203, %v204
    %v206 = vrot.slane %v205, 2
    %v207 = vadd.f32 %v205, %v206
    %v208 = vrot.slane %v207, 1
    %v209 = vadd.f32 %v207, %v208
    %v210 = vadd.f32 %v86, %v102
    %v211 = vrot.slane %v210, 4
    %v212 = vadd.f32 %v210, %v211
    %v213 = vrot.slane %v212, 2
    %v214 = vadd.f32 %v212, %v213
    %v215 = vrot.slane %v214, 1
    %v216 = vadd.f32 %v214, %v215
    %v217 = vadd.f32 %v87, %v103
    %v218 = vrot.slane %v217, 4
    %v219 = vadd.f32 %v217, %v218
    %v220 = vrot.slane %v219, 2
    %v221 = vadd.f32 %v219, %v220
    %v222 = vrot.slane %v221, 1
    %v223 = vadd.f32 %v221, %v222
    %v224 = vadd.f32 %v88, %v104
    %v225 = vrot.slane %v224, 4
    %v226 = vadd.f32 %v224, %v225
    %v227 = vrot.slane %v226, 2
    %v228 = vadd.f32 %v226, %v227
    %v229 = vrot.slane %v228, 1
    %v230 = vadd.f32 %v228, %v229
    %v231 = vadd.f32 %v89, %v105
    %v232 = vrot.slane %v231, 4
    %v233 = vadd.f32 %v231, %v232
    %v234 = vrot.slane %v233, 2
    %v235 = vadd.f32 %v233, %v234
    %v236 = vrot.slane %v235, 1
    %v237 = vadd.f32 %v235, %v236
    %v238 = vadd.f32 %v90, %v106
    %v239 = vrot.slane %v238, 4
    %v240 = vadd.f32 %v238, %v239
    %v241 = vrot.slane %v240, 2
    %v242 = vadd.f32 %v240, %v241
    %v243 = vrot.slane %v242, 1
    %v244 = vadd.f32 %v242, %v243
    %v245 = vadd.f32 %v91, %v107
    %v246 = vrot.slane %v245, 4
    %v247 = vadd.f32 %v245, %v246
    %v248 = vrot.slane %v247, 2
    %v249 = vadd.f32 %v247, %v248
    %v250 = vrot.slane %v249, 1
    %v251 = vadd.f32 %v249, %v250
    %v252 = vadd.f32 %v108, %v124
    %v253 = vrot.slane %v252, 4
    %v254 = vadd.f32 %v252, %v253
    %v255 = vrot.slane %v254, 2
    %v256 = vadd.f32 %v254, %v255
    %v257 = vrot.slane %v256, 1
    %v258 = vadd.f32 %v256, %v257
    %v259 = vadd.f32 %v109, %v125
    %v260 = vrot.slane %v259, 4
    %v261 = vadd.f32 %v259, %v260
    %v262 = vrot.slane %v261, 2
    %v263 = vadd.f32 %v261, %v262
    %v264 = vrot.slane %v263, 1
    %v265 = vadd.f32 %v263, %v264
    %v266 = vadd.f32 %v110, %v126
    %v267 = vrot.slane %v266, 4
    %v268 = vadd.f32 %v266, %v267
    %v269 = vrot.slane %v268, 2
    %v270 = vadd.f32 %v268, %v269
    %v271 = vrot.slane %v270, 1
    %v272 = vadd.f32 %v270, %v271
    %v273 = vadd.f32 %v111, %v127
    %v274 = vrot.slane %v273, 4
    %v275 = vadd.f32 %v273, %v274
    %v276 = vrot.slane %v275, 2
    %v277 = vadd.f32 %v275, %v276
    %v278 = vrot.slane %v277, 1
    %v279 = vadd.f32 %v277, %v278
    %v280 = vadd.f32 %v112, %v128
    %v281 = vrot.slane %v280, 4
    %v282 = vadd.f32 %v280, %v281
    %v283 = vrot.slane %v282, 2
    %v284 = vadd.f32 %v282, %v283
    %v285 = vrot.slane %v284, 1
    %v286 = vadd.f32 %v284, %v285
    %v287 = vadd.f32 %v113, %v129
    %v288 = vrot.slane %v287, 4
    %v289 = vadd.f32 %v287, %v288
    %v290 = vrot.slane %v289, 2
    %v291 = vadd.f32 %v289, %v290
    %v292 = vrot.slane %v291, 1
    %v293 = vadd.f32 %v291, %v292
    %v294 = vadd.f32 %v114, %v130
    %v295 = vrot.slane %v294, 4
    %v296 = vadd.f32 %v294, %v295
    %v297 = vrot.slane %v296, 2
    %v298 = vadd.f32 %v296, %v297
    %v299 = vrot.slane %v298, 1
    %v300 = vadd.f32 %v298, %v299
    %v301 = vadd.f32 %v115, %v131
    %v302 = vrot.slane %v301, 4
    %v303 = vadd.f32 %v301, %v302
    %v304 = vrot.slane %v303, 2
    %v305 = vadd.f32 %v303, %v304
    %v306 = vrot.slane %v305, 1
    %v307 = vadd.f32 %v305, %v306
    %v308 = vadd.f32 %v116, %v132
    %v309 = vrot.slane %v308, 4
    %v310 = vadd.f32 %v308, %v309
    %v311 = vrot.slane %v310, 2
    %v312 = vadd.f32 %v310, %v311
    %v313 = vrot.slane %v312, 1
    %v314 = vadd.f32 %v312, %v313
    %v315 = vadd.f32 %v117, %v133
    %v316 = vrot.slane %v315, 4
    %v317 = vadd.f32 %v315, %v316
    %v318 = vrot.slane %v317, 2
    %v319 = vadd.f32 %v317, %v318
    %v320 = vrot.slane %v319, 1
    %v321 = vadd.f32 %v319, %v320
    %v322 = vadd.f32 %v118, %v134
    %v323 = vrot.slane %v322, 4
    %v324 = vadd.f32 %v322, %v323
    %v325 = vrot.slane %v324, 2
    %v326 = vadd.f32 %v324, %v325
    %v327 = vrot.slane %v326, 1
    %v328 = vadd.f32 %v326, %v327
    %v329 = vadd.f32 %v119, %v135
    %v330 = vrot.slane %v329, 4
    %v331 = vadd.f32 %v329, %v330
    %v332 = vrot.slane %v331, 2
    %v333 = vadd.f32 %v331, %v332
    %v334 = vrot.slane %v333, 1
    %v335 = vadd.f32 %v333, %v334
    %v336 = vadd.f32 %v120, %v136
    %v337 = vrot.slane %v336, 4
    %v338 = vadd.f32 %v336, %v337
    %v339 = vrot.slane %v338, 2
    %v340 = vadd.f32 %v338, %v339
    %v341 = vrot.slane %v340, 1
    %v342 = vadd.f32 %v340, %v341
    %v343 = vadd.f32 %v121, %v137
    %v344 = vrot.slane %v343, 4
    %v345 = vadd.f32 %v343, %v344
    %v346 = vrot.slane %v345, 2
    %v347 = vadd.f32 %v345, %v346
    %v348 = vrot.slane %v347, 1
    %v349 = vadd.f32 %v347, %v348
    %v350 = vadd.f32 %v122, %v138
    %v351 = vrot.slane %v350, 4
    %v352 = vadd.f32 %v350, %v351
    %v353 = vrot.slane %v352, 2
    %v354 = vadd.f32 %v352, %v353
    %v355 = vrot.slane %v354, 1
    %v356 = vadd.f32 %v354, %v355
    %v357 = vadd.f32 %v123, %v139
    %v358 = vrot.slane %v357, 4
    %v359 = vadd.f32 %v357, %v358
    %v360 = vrot.slane %v359, 2
    %v361 = vadd.f32 %v359, %v360
    %v362 = vrot.slane %v361, 1
    %v363 = vadd.f32 %v361, %v362
    %v364 = vpack.c.bf16 %v146, %v146
    %v365 = vpack.c.bf16 %v153, %v153
    %v366 = vpack.c.bf16 %v160, %v160
    %v367 = vpack.c.bf16 %v167, %v167
    %v368 = vpack.c.bf16 %v174, %v174
    %v369 = vpack.c.bf16 %v181, %v181
    %v370 = vpack.c.bf16 %v188, %v188
    %v371 = vpack.c.bf16 %v195, %v195
    %v372 = vpack.c.bf16 %v202, %v202
    %v373 = vpack.c.bf16 %v209, %v209
    %v374 = vpack.c.bf16 %v216, %v216
    %v375 = vpack.c.bf16 %v223, %v223
    %v376 = vpack.c.bf16 %v230, %v230
    %v377 = vpack.c.bf16 %v237, %v237
    %v378 = vpack.c.bf16 %v244, %v244
    %v379 = vpack.c.bf16 %v251, %v251
    %v380 = vpack.c.bf16 %v258, %v258
    %v381 = vpack.c.bf16 %v265, %v265
    %v382 = vpack.c.bf16 %v272, %v272
    %v383 = vpack.c.bf16 %v279, %v279
    %v384 = vpack.c.bf16 %v286, %v286
    %v385 = vpack.c.bf16 %v293, %v293
    %v386 = vpack.c.bf16 %v300, %v300
    %v387 = vpack.c.bf16 %v307, %v307
    %v388 = vpack.c.bf16 %v314, %v314
    %v389 = vpack.c.bf16 %v321, %v321
    %v390 = vpack.c.bf16 %v328, %v328
    %v391 = vpack.c.bf16 %v335, %v335
    %v392 = vpack.c.bf16 %v342, %v342
    %v393 = vpack.c.bf16 %v349, %v349
    %v394 = vpack.c.bf16 %v356, %v356
    %v395 = vpack.c.bf16 %v363, %v363
    %v396 = vld [vmem:[#allocation5] sm:$0xf]
    %v397 = vld [vmem:[#allocation5 + $0x4] sm:$0xf]
    %v398 = vld [vmem:[#allocation5 + $0x8] sm:$0xf]
    %v399 = vld [vmem:[#allocation5 + $0xc] sm:$0xf]
    %v400 = vld [vmem:[#allocation5 + $0x10] sm:$0xf]
    %v401 = vld [vmem:[#allocation5 + $0x14] sm:$0xf]
    %v402 = vld [vmem:[#allocation5 + $0x18] sm:$0xf]
    %v403 = vld [vmem:[#allocation5 + $0x1c] sm:$0xf]
    %v404 = vld [vmem:[#allocation5 + $0x20] sm:$0xf]
    %v405 = vld [vmem:[#allocation5 + $0x24] sm:$0xf]
    %v406 = vld [vmem:[#allocation5 + $0x28] sm:$0xf]
    %v407 = vld [vmem:[#allocation5 + $0x2c] sm:$0xf]
    %v408 = vld [vmem:[#allocation5 + $0x30] sm:$0xf]
    %v409 = vld [vmem:[#allocation5 + $0x34] sm:$0xf]
    %v410 = vld [vmem:[#allocation5 + $0x38] sm:$0xf]
    %v411 = vld [vmem:[#allocation5 + $0x3c] sm:$0xf]
    %v412 = vld [vmem:[#allocation5 + $0x40] sm:$0xf]
    %v413 = vld [vmem:[#allocation5 + $0x44] sm:$0xf]
    %v414 = vld [vmem:[#allocation5 + $0x48] sm:$0xf]
    %v415 = vld [vmem:[#allocation5 + $0x4c] sm:$0xf]
    %v416 = vld [vmem:[#allocation5 + $0x50] sm:$0xf]
    %v417 = vld [vmem:[#allocation5 + $0x54] sm:$0xf]
    %v418 = vld [vmem:[#allocation5 + $0x58] sm:$0xf]
    %v419 = vld [vmem:[#allocation5 + $0x5c] sm:$0xf]
    %v420 = vld [vmem:[#allocation5 + $0x60] sm:$0xf]
    %v421 = vld [vmem:[#allocation5 + $0x64] sm:$0xf]
    %v422 = vld [vmem:[#allocation5 + $0x68] sm:$0xf]
    %v423 = vld [vmem:[#allocation5 + $0x6c] sm:$0xf]
    %v424 = vld [vmem:[#allocation5 + $0x70] sm:$0xf]
    %v425 = vld [vmem:[#allocation5 + $0x74] sm:$0xf]
    %v426 = vld [vmem:[#allocation5 + $0x78] sm:$0xf]
    %v427 = vld [vmem:[#allocation5 + $0x7c] sm:$0xf]
    %v428 = vld [vmem:[#allocation5 + $0x80] sm:$0xf]
    %v429 = vld [vmem:[#allocation5 + $0x84] sm:$0xf]
    %v430 = vld [vmem:[#allocation5 + $0x88] sm:$0xf]
    %v431 = vld [vmem:[#allocation5 + $0x8c] sm:$0xf]
    %v432 = vld [vmem:[#allocation5 + $0x90] sm:$0xf]
    %v433 = vld [vmem:[#allocation5 + $0x94] sm:$0xf]
    %v434 = vld [vmem:[#allocation5 + $0x98] sm:$0xf]
    %v435 = vld [vmem:[#allocation5 + $0x9c] sm:$0xf]
    %v436 = vld [vmem:[#allocation5 + $0xa0] sm:$0xf]
    %v437 = vld [vmem:[#allocation5 + $0xa4] sm:$0xf]
    %v438 = vld [vmem:[#allocation5 + $0xa8] sm:$0xf]
    %v439 = vld [vmem:[#allocation5 + $0xac] sm:$0xf]
    %v440 = vld [vmem:[#allocation5 + $0xb0] sm:$0xf]
    %v441 = vld [vmem:[#allocation5 + $0xb4] sm:$0xf]
    %v442 = vld [vmem:[#allocation5 + $0xb8] sm:$0xf]
    %v443 = vld [vmem:[#allocation5 + $0xbc] sm:$0xf]
    %v444 = vld [vmem:[#allocation5 + $0xc0] sm:$0xf]
    %v445 = vld [vmem:[#allocation5 + $0xc4] sm:$0xf]
    %v446 = vld [vmem:[#allocation5 + $0xc8] sm:$0xf]
    %v447 = vld [vmem:[#allocation5 + $0xcc] sm:$0xf]
    %v448 = vld [vmem:[#allocation5 + $0xd0] sm:$0xf]
    %v449 = vld [vmem:[#allocation5 + $0xd4] sm:$0xf]
    %v450 = vld [vmem:[#allocation5 + $0xd8] sm:$0xf]
    %v451 = vld [vmem:[#allocation5 + $0xdc] sm:$0xf]
    %v452 = vld [vmem:[#allocation5 + $0xe0] sm:$0xf]
    %v453 = vld [vmem:[#allocation5 + $0xe4] sm:$0xf]
    %v454 = vld [vmem:[#allocation5 + $0xe8] sm:$0xf]
    %v455 = vld [vmem:[#allocation5 + $0xec] sm:$0xf]
    %v456 = vld [vmem:[#allocation5 + $0xf0] sm:$0xf]
    %v457 = vld [vmem:[#allocation5 + $0xf4] sm:$0xf]
    %v458 = vld [vmem:[#allocation5 + $0xf8] sm:$0xf]
    %v459 = vld [vmem:[#allocation5 + $0xfc] sm:$0xf]
    %v460 = vld [vmem:[#allocation5 + $0x100] sm:$0xf]
    %v461 = vld [vmem:[#allocation5 + $0x104] sm:$0xf]
    %v462 = vld [vmem:[#allocation5 + $0x108] sm:$0xf]
    %v463 = vld [vmem:[#allocation5 + $0x10c] sm:$0xf]
    %v464 = vld [vmem:[#allocation5 + $0x110] sm:$0xf]
    %v465 = vld [vmem:[#allocation5 + $0x114] sm:$0xf]
    %v466 = vld [vmem:[#allocation5 + $0x118] sm:$0xf]
    %v467 = vld [vmem:[#allocation5 + $0x11c] sm:$0xf]
    %v468 = vld [vmem:[#allocation5 + $0x120] sm:$0xf]
    %v469 = vld [vmem:[#allocation5 + $0x124] sm:$0xf]
    %v470 = vld [vmem:[#allocation5 + $0x128] sm:$0xf]
    %v471 = vld [vmem:[#allocation5 + $0x12c] sm:$0xf]
    %v472 = vld [vmem:[#allocation5 + $0x130] sm:$0xf]
    %v473 = vld [vmem:[#allocation5 + $0x134] sm:$0xf]
    %v474 = vld [vmem:[#allocation5 + $0x138] sm:$0xf]
    %v475 = vld [vmem:[#allocation5 + $0x13c] sm:$0xf]
    %v476 = vld [vmem:[#allocation5 + $0x140] sm:$0xf]
    %v477 = vld [vmem:[#allocation5 + $0x144] sm:$0xf]
    %v478 = vld [vmem:[#allocation5 + $0x148] sm:$0xf]
    %v479 = vld [vmem:[#allocation5 + $0x14c] sm:$0xf]
    %v480 = vld [vmem:[#allocation5 + $0x150] sm:$0xf]
    %v481 = vld [vmem:[#allocation5 + $0x154] sm:$0xf]
    %v482 = vld [vmem:[#allocation5 + $0x158] sm:$0xf]
    %v483 = vld [vmem:[#allocation5 + $0x15c] sm:$0xf]
    %v484 = vld [vmem:[#allocation5 + $0x160] sm:$0xf]
    %v485 = vld [vmem:[#allocation5 + $0x164] sm:$0xf]
    %v486 = vld [vmem:[#allocation5 + $0x168] sm:$0xf]
    %v487 = vld [vmem:[#allocation5 + $0x16c] sm:$0xf]
    %v488 = vld [vmem:[#allocation5 + $0x170] sm:$0xf]
    %v489 = vld [vmem:[#allocation5 + $0x174] sm:$0xf]
    %v490 = vld [vmem:[#allocation5 + $0x178] sm:$0xf]
    %v491 = vld [vmem:[#allocation5 + $0x17c] sm:$0xf]
    %v492 = vld [vmem:[#allocation5 + $0x180] sm:$0xf]
    %v493 = vld [vmem:[#allocation5 + $0x184] sm:$0xf]
    %v494 = vld [vmem:[#allocation5 + $0x188] sm:$0xf]
    %v495 = vld [vmem:[#allocation5 + $0x18c] sm:$0xf]
    %v496 = vld [vmem:[#allocation5 + $0x190] sm:$0xf]
    %v497 = vld [vmem:[#allocation5 + $0x194] sm:$0xf]
    %v498 = vld [vmem:[#allocation5 + $0x198] sm:$0xf]
    %v499 = vld [vmem:[#allocation5 + $0x19c] sm:$0xf]
    %v500 = vld [vmem:[#allocation5 + $0x1a0] sm:$0xf]
    %v501 = vld [vmem:[#allocation5 + $0x1a4] sm:$0xf]
    %v502 = vld [vmem:[#allocation5 + $0x1a8] sm:$0xf]
    %v503 = vld [vmem:[#allocation5 + $0x1ac] sm:$0xf]
    %v504 = vld [vmem:[#allocation5 + $0x1b0] sm:$0xf]
    %v505 = vld [vmem:[#allocation5 + $0x1b4] sm:$0xf]
    %v506 = vld [vmem:[#allocation5 + $0x1b8] sm:$0xf]
    %v507 = vld [vmem:[#allocation5 + $0x1bc] sm:$0xf]
    %v508 = vld [vmem:[#allocation5 + $0x1c0] sm:$0xf]
    %v509 = vld [vmem:[#allocation5 + $0x1c4] sm:$0xf]
    %v510 = vld [vmem:[#allocation5 + $0x1c8] sm:$0xf]
    %v511 = vld [vmem:[#allocation5 + $0x1cc] sm:$0xf]
    %v512 = vld [vmem:[#allocation5 + $0x1d0] sm:$0xf]
    %v513 = vld [vmem:[#allocation5 + $0x1d4] sm:$0xf]
    %v514 = vld [vmem:[#allocation5 + $0x1d8] sm:$0xf]
    %v515 = vld [vmem:[#allocation5 + $0x1dc] sm:$0xf]
    %v516 = vld [vmem:[#allocation5 + $0x1e0] sm:$0xf]
    %v517 = vld [vmem:[#allocation5 + $0x1e4] sm:$0xf]
    %v518 = vld [vmem:[#allocation5 + $0x1e8] sm:$0xf]
    %v519 = vld [vmem:[#allocation5 + $0x1ec] sm:$0xf]
    %v520 = vld [vmem:[#allocation5 + $0x1f0] sm:$0xf]
    %v521 = vld [vmem:[#allocation5 + $0x1f4] sm:$0xf]
    %v522 = vld [vmem:[#allocation5 + $0x1f8] sm:$0xf]
    %v523 = vld [vmem:[#allocation5 + $0x1fc] sm:$0xf]
    %v524 = vld [vmem:[#allocation5 + $0x200] sm:$0xf]
    %v525 = vld [vmem:[#allocation5 + $0x204] sm:$0xf]
    %v526 = vld [vmem:[#allocation5 + $0x208] sm:$0xf]
    %v527 = vld [vmem:[#allocation5 + $0x20c] sm:$0xf]
    %v528 = vld [vmem:[#allocation5 + $0x210] sm:$0xf]
    %v529 = vld [vmem:[#allocation5 + $0x214] sm:$0xf]
    %v530 = vld [vmem:[#allocation5 + $0x218] sm:$0xf]
    %v531 = vld [vmem:[#allocation5 + $0x21c] sm:$0xf]
    %v532 = vld [vmem:[#allocation5 + $0x220] sm:$0xf]
    %v533 = vld [vmem:[#allocation5 + $0x224] sm:$0xf]
    %v534 = vld [vmem:[#allocation5 + $0x228] sm:$0xf]
    %v535 = vld [vmem:[#allocation5 + $0x22c] sm:$0xf]
    %v536 = vld [vmem:[#allocation5 + $0x230] sm:$0xf]
    %v537 = vld [vmem:[#allocation5 + $0x234] sm:$0xf]
    %v538 = vld [vmem:[#allocation5 + $0x238] sm:$0xf]
    %v539 = vld [vmem:[#allocation5 + $0x23c] sm:$0xf]
    %v540 = vld [vmem:[#allocation5 + $0x240] sm:$0xf]
    %v541 = vld [vmem:[#allocation5 + $0x244] sm:$0xf]
    %v542 = vld [vmem:[#allocation5 + $0x248] sm:$0xf]
    %v543 = vld [vmem:[#allocation5 + $0x24c] sm:$0xf]
    %v544 = vld [vmem:[#allocation5 + $0x250] sm:$0xf]
    %v545 = vld [vmem:[#allocation5 + $0x254] sm:$0xf]
    %v546 = vld [vmem:[#allocation5 + $0x258] sm:$0xf]
    %v547 = vld [vmem:[#allocation5 + $0x25c] sm:$0xf]
    %v548 = vld [vmem:[#allocation5 + $0x260] sm:$0xf]
    %v549 = vld [vmem:[#allocation5 + $0x264] sm:$0xf]
    %v550 = vld [vmem:[#allocation5 + $0x268] sm:$0xf]
    %v551 = vld [vmem:[#allocation5 + $0x26c] sm:$0xf]
    %v552 = vld [vmem:[#allocation5 + $0x270] sm:$0xf]
    %v553 = vld [vmem:[#allocation5 + $0x274] sm:$0xf]
    %v554 = vld [vmem:[#allocation5 + $0x278] sm:$0xf]
    %v555 = vld [vmem:[#allocation5 + $0x27c] sm:$0xf]
    %v556 = vld [vmem:[#allocation5 + $0x280] sm:$0xf]
    %v557 = vld [vmem:[#allocation5 + $0x284] sm:$0xf]
    %v558 = vld [vmem:[#allocation5 + $0x288] sm:$0xf]
    %v559 = vld [vmem:[#allocation5 + $0x28c] sm:$0xf]
    %v560 = vld [vmem:[#allocation5 + $0x290] sm:$0xf]
    %v561 = vld [vmem:[#allocation5 + $0x294] sm:$0xf]
    %v562 = vld [vmem:[#allocation5 + $0x298] sm:$0xf]
    %v563 = vld [vmem:[#allocation5 + $0x29c] sm:$0xf]
    %v564 = vld [vmem:[#allocation5 + $0x2a0] sm:$0xf]
    %v565 = vld [vmem:[#allocation5 + $0x2a4] sm:$0xf]
    %v566 = vld [vmem:[#allocation5 + $0x2a8] sm:$0xf]
    %v567 = vld [vmem:[#allocation5 + $0x2ac] sm:$0xf]
    %v568 = vld [vmem:[#allocation5 + $0x2b0] sm:$0xf]
    %v569 = vld [vmem:[#allocation5 + $0x2b4] sm:$0xf]
    %v570 = vld [vmem:[#allocation5 + $0x2b8] sm:$0xf]
    %v571 = vld [vmem:[#allocation5 + $0x2bc] sm:$0xf]
    %v572 = vld [vmem:[#allocation5 + $0x2c0] sm:$0xf]
    %v573 = vld [vmem:[#allocation5 + $0x2c4] sm:$0xf]
    %v574 = vld [vmem:[#allocation5 + $0x2c8] sm:$0xf]
    %v575 = vld [vmem:[#allocation5 + $0x2cc] sm:$0xf]
    %v576 = vld [vmem:[#allocation5 + $0x2d0] sm:$0xf]
    %v577 = vld [vmem:[#allocation5 + $0x2d4] sm:$0xf]
    %v578 = vld [vmem:[#allocation5 + $0x2d8] sm:$0xf]
    %v579 = vld [vmem:[#allocation5 + $0x2dc] sm:$0xf]
    %v580 = vld [vmem:[#allocation5 + $0x2e0] sm:$0xf]
    %v581 = vld [vmem:[#allocation5 + $0x2e4] sm:$0xf]
    %v582 = vld [vmem:[#allocation5 + $0x2e8] sm:$0xf]
    %v583 = vld [vmem:[#allocation5 + $0x2ec] sm:$0xf]
    %v584 = vld [vmem:[#allocation5 + $0x2f0] sm:$0xf]
    %v585 = vld [vmem:[#allocation5 + $0x2f4] sm:$0xf]
    %v586 = vld [vmem:[#allocation5 + $0x2f8] sm:$0xf]
    %v587 = vld [vmem:[#allocation5 + $0x2fc] sm:$0xf]
    %v588 = vld [vmem:[#allocation5 + $0x300] sm:$0xf]
    %v589 = vld [vmem:[#allocation5 + $0x304] sm:$0xf]
    %v590 = vld [vmem:[#allocation5 + $0x308] sm:$0xf]
    %v591 = vld [vmem:[#allocation5 + $0x30c] sm:$0xf]
    %v592 = vld [vmem:[#allocation5 + $0x310] sm:$0xf]
    %v593 = vld [vmem:[#allocation5 + $0x314] sm:$0xf]
    %v594 = vld [vmem:[#allocation5 + $0x318] sm:$0xf]
    %v595 = vld [vmem:[#allocation5 + $0x31c] sm:$0xf]
    %v596 = vld [vmem:[#allocation5 + $0x320] sm:$0xf]
    %v597 = vld [vmem:[#allocation5 + $0x324] sm:$0xf]
    %v598 = vld [vmem:[#allocation5 + $0x328] sm:$0xf]
    %v599 = vld [vmem:[#allocation5 + $0x32c] sm:$0xf]
    %v600 = vld [vmem:[#allocation5 + $0x330] sm:$0xf]
    %v601 = vld [vmem:[#allocation5 + $0x334] sm:$0xf]
    %v602 = vld [vmem:[#allocation5 + $0x338] sm:$0xf]
    %v603 = vld [vmem:[#allocation5 + $0x33c] sm:$0xf]
    %v604 = vld [vmem:[#allocation5 + $0x340] sm:$0xf]
    %v605 = vld [vmem:[#allocation5 + $0x344] sm:$0xf]
    %v606 = vld [vmem:[#allocation5 + $0x348] sm:$0xf]
    %v607 = vld [vmem:[#allocation5 + $0x34c] sm:$0xf]
    %v608 = vld [vmem:[#allocation5 + $0x350] sm:$0xf]
    %v609 = vld [vmem:[#allocation5 + $0x354] sm:$0xf]
    %v610 = vld [vmem:[#allocation5 + $0x358] sm:$0xf]
    %v611 = vld [vmem:[#allocation5 + $0x35c] sm:$0xf]
    %v612 = vld [vmem:[#allocation5 + $0x360] sm:$0xf]
    %v613 = vld [vmem:[#allocation5 + $0x364] sm:$0xf]
    %v614 = vld [vmem:[#allocation5 + $0x368] sm:$0xf]
    %v615 = vld [vmem:[#allocation5 + $0x36c] sm:$0xf]
    %v616 = vld [vmem:[#allocation5 + $0x370] sm:$0xf]
    %v617 = vld [vmem:[#allocation5 + $0x374] sm:$0xf]
    %v618 = vld [vmem:[#allocation5 + $0x378] sm:$0xf]
    %v619 = vld [vmem:[#allocation5 + $0x37c] sm:$0xf]
    %v620 = vld [vmem:[#allocation5 + $0x380] sm:$0xf]
    %v621 = vld [vmem:[#allocation5 + $0x384] sm:$0xf]
    %v622 = vld [vmem:[#allocation5 + $0x388] sm:$0xf]
    %v623 = vld [vmem:[#allocation5 + $0x38c] sm:$0xf]
    %v624 = vld [vmem:[#allocation5 + $0x390] sm:$0xf]
    %v625 = vld [vmem:[#allocation5 + $0x394] sm:$0xf]
    %v626 = vld [vmem:[#allocation5 + $0x398] sm:$0xf]
    %v627 = vld [vmem:[#allocation5 + $0x39c] sm:$0xf]
    %v628 = vld [vmem:[#allocation5 + $0x3a0] sm:$0xf]
    %v629 = vld [vmem:[#allocation5 + $0x3a4] sm:$0xf]
    %v630 = vld [vmem:[#allocation5 + $0x3a8] sm:$0xf]
    %v631 = vld [vmem:[#allocation5 + $0x3ac] sm:$0xf]
    %v632 = vld [vmem:[#allocation5 + $0x3b0] sm:$0xf]
    %v633 = vld [vmem:[#allocation5 + $0x3b4] sm:$0xf]
    %v634 = vld [vmem:[#allocation5 + $0x3b8] sm:$0xf]
    %v635 = vld [vmem:[#allocation5 + $0x3bc] sm:$0xf]
    %v636 = vld [vmem:[#allocation5 + $0x3c0] sm:$0xf]
    %v637 = vld [vmem:[#allocation5 + $0x3c4] sm:$0xf]
    %v638 = vld [vmem:[#allocation5 + $0x3c8] sm:$0xf]
    %v639 = vld [vmem:[#allocation5 + $0x3cc] sm:$0xf]
    %v640 = vld [vmem:[#allocation5 + $0x3d0] sm:$0xf]
    %v641 = vld [vmem:[#allocation5 + $0x3d4] sm:$0xf]
    %v642 = vld [vmem:[#allocation5 + $0x3d8] sm:$0xf]
    %v643 = vld [vmem:[#allocation5 + $0x3dc] sm:$0xf]
    %v644 = vld [vmem:[#allocation5 + $0x3e0] sm:$0xf]
    %v645 = vld [vmem:[#allocation5 + $0x3e4] sm:$0xf]
    %v646 = vld [vmem:[#allocation5 + $0x3e8] sm:$0xf]
    %v647 = vld [vmem:[#allocation5 + $0x3ec] sm:$0xf]
    %v648 = vld [vmem:[#allocation5 + $0x3f0] sm:$0xf]
    %v649 = vld [vmem:[#allocation5 + $0x3f4] sm:$0xf]
    %v650 = vld [vmem:[#allocation5 + $0x3f8] sm:$0xf]
    %v651 = vld [vmem:[#allocation5 + $0x3fc] sm:$0xf]
    %v684 = vunpack.c.l.b16 %v364
    %v685 = vunpack.c.l.b16 %v365
    %v686 = vunpack.c.l.b16 %v366
    %v687 = vunpack.c.l.b16 %v367
    %v688 = vunpack.c.l.b16 %v368
    %v689 = vunpack.c.l.b16 %v369
    %v690 = vunpack.c.l.b16 %v370
    %v691 = vunpack.c.l.b16 %v371
    %v692 = vunpack.c.l.b16 %v372
    %v693 = vunpack.c.l.b16 %v373
    %v694 = vunpack.c.l.b16 %v374
    %v695 = vunpack.c.l.b16 %v375
    %v696 = vunpack.c.l.b16 %v376
    %v697 = vunpack.c.l.b16 %v377
    %v698 = vunpack.c.l.b16 %v378
    %v699 = vunpack.c.l.b16 %v379
    %v700 = vunpack.c.l.b16 %v380
    %v701 = vunpack.c.l.b16 %v381
    %v702 = vunpack.c.l.b16 %v382
    %v703 = vunpack.c.l.b16 %v383
    %v704 = vunpack.c.l.b16 %v384
    %v705 = vunpack.c.l.b16 %v385
    %v706 = vunpack.c.l.b16 %v386
    %v707 = vunpack.c.l.b16 %v387
    %v708 = vunpack.c.l.b16 %v388
    %v709 = vunpack.c.l.b16 %v389
    %v710 = vunpack.c.l.b16 %v390
    %v711 = vunpack.c.l.b16 %v391
    %v712 = vunpack.c.l.b16 %v392
    %v713 = vunpack.c.l.b16 %v393
    %v714 = vunpack.c.l.b16 %v394
    %v715 = vunpack.c.l.b16 %v395
    %vm716 = vcmask 1041409
    %v717 = vsel %vm716, %v700, %v684
    %v718 = vsel %vm716, %v701, %v685
    %v719 = vsel %vm716, %v702, %v686
    %v720 = vsel %vm716, %v703, %v687
    %v721 = vsel %vm716, %v704, %v688
    %v722 = vsel %vm716, %v705, %v689
    %v723 = vsel %vm716, %v706, %v690
    %v724 = vsel %vm716, %v707, %v691
    %v725 = vsel %vm716, %v708, %v692
    %v726 = vsel %vm716, %v709, %v693
    %v727 = vsel %vm716, %v710, %v694
    %v728 = vsel %vm716, %v711, %v695
    %v729 = vsel %vm716, %v712, %v696
    %v730 = vsel %vm716, %v713, %v697
    %v731 = vsel %vm716, %v714, %v698
    %v732 = vsel %vm716, %v715, %v699
    %v733 = vpack.c.b16 %v717, %v717
    %v734 = vpack.c.b16 %v718, %v718
    %v735 = vpack.c.b16 %v719, %v719
    %v736 = vpack.c.b16 %v720, %v720
    %v737 = vpack.c.b16 %v721, %v721
    %v738 = vpack.c.b16 %v722, %v722
    %v739 = vpack.c.b16 %v723, %v723
    %v740 = vpack.c.b16 %v724, %v724
    %v741 = vpack.c.b16 %v725, %v725
    %v742 = vpack.c.b16 %v726, %v726
    %v743 = vpack.c.b16 %v727, %v727
    %v744 = vpack.c.b16 %v728, %v728
    %v745 = vpack.c.b16 %v729, %v729
    %v746 = vpack.c.b16 %v730, %v730
    %v747 = vpack.c.b16 %v731, %v731
    %v748 = vpack.c.b16 %v732, %v732
    %v1021 = vunpack.c.l.b16 %v396
    %v1022 = vunpack.c.l.b16 %v397
    %v1023 = vunpack.c.l.b16 %v398
    %v1024 = vunpack.c.l.b16 %v399
    %v1025 = vunpack.c.l.b16 %v400
    %v1026 = vunpack.c.l.b16 %v401
    %v1027 = vunpack.c.l.b16 %v402
    %v1028 = vunpack.c.l.b16 %v403
    %v1029 = vunpack.c.l.b16 %v404
    %v1030 = vunpack.c.l.b16 %v405
    %v1031 = vunpack.c.l.b16 %v406
    %v1032 = vunpack.c.l.b16 %v407
    %v1033 = vunpack.c.l.b16 %v408
    %v1034 = vunpack.c.l.b16 %v409
    %v1035 = vunpack.c.l.b16 %v410
    %v1036 = vunpack.c.l.b16 %v411
    %v1037 = vunpack.c.l.b16 %v412
    %v1038 = vunpack.c.l.b16 %v413
    %v1039 = vunpack.c.l.b16 %v414
    %v1040 = vunpack.c.l.b16 %v415
    %v1041 = vunpack.c.l.b16 %v416
    %v1042 = vunpack.c.l.b16 %v417
    %v1043 = vunpack.c.l.b16 %v418
    %v1044 = vunpack.c.l.b16 %v419
    %v1045 = vunpack.c.l.b16 %v420
    %v1046 = vunpack.c.l.b16 %v421
    %v1047 = vunpack.c.l.b16 %v422
    %v1048 = vunpack.c.l.b16 %v423
    %v1049 = vunpack.c.l.b16 %v424
    %v1050 = vunpack.c.l.b16 %v425
    %v1051 = vunpack.c.l.b16 %v426
    %v1052 = vunpack.c.l.b16 %v427
    %v1053 = vunpack.c.l.b16 %v428
    %v1054 = vunpack.c.l.b16 %v429
    %v1055 = vunpack.c.l.b16 %v430
    %v1056 = vunpack.c.l.b16 %v431
    %v1057 = vunpack.c.l.b16 %v432
    %v1058 = vunpack.c.l.b16 %v433
    %v1059 = vunpack.c.l.b16 %v434
    %v1060 = vunpack.c.l.b16 %v435
    %v1061 = vunpack.c.l.b16 %v436
    %v1062 = vunpack.c.l.b16 %v437
    %v1063 = vunpack.c.l.b16 %v438
    %v1064 = vunpack.c.l.b16 %v439
    %v1065 = vunpack.c.l.b16 %v440
    %v1066 = vunpack.c.l.b16 %v441
    %v1067 = vunpack.c.l.b16 %v442
    %v1068 = vunpack.c.l.b16 %v443
    %v1069 = vunpack.c.l.b16 %v444
    %v1070 = vunpack.c.l.b16 %v445
    %v1071 = vunpack.c.l.b16 %v446
    %v1072 = vunpack.c.l.b16 %v447
    %v1073 = vunpack.c.l.b16 %v448
    %v1074 = vunpack.c.l.b16 %v449
    %v1075 = vunpack.c.l.b16 %v450
    %v1076 = vunpack.c.l.b16 %v451
    %v1077 = vunpack.c.l.b16 %v452
    %v1078 = vunpack.c.l.b16 %v453
    %v1079 = vunpack.c.l.b16 %v454
    %v1080 = vunpack.c.l.b16 %v455
    %v1081 = vunpack.c.l.b16 %v456
    %v1082 = vunpack.c.l.b16 %v457
    %v1083 = vunpack.c.l.b16 %v458
    %v1084 = vunpack.c.l.b16 %v459
    %v1085 = vunpack.c.l.b16 %v460
    %v1086 = vunpack.c.l.b16 %v461
    %v1087 = vunpack.c.l.b16 %v462
    %v1088 = vunpack.c.l.b16 %v463
    %v1089 = vunpack.c.l.b16 %v464
    %v1090 = vunpack.c.l.b16 %v465
    %v1091 = vunpack.c.l.b16 %v466
    %v1092 = vunpack.c.l.b16 %v467
    %v1093 = vunpack.c.l.b16 %v468
    %v1094 = vunpack.c.l.b16 %v469
    %v1095 = vunpack.c.l.b16 %v470
    %v1096 = vunpack.c.l.b16 %v471
    %v1097 = vunpack.c.l.b16 %v472
    %v1098 = vunpack.c.l.b16 %v473
    %v1099 = vunpack.c.l.b16 %v474
    %v1100 = vunpack.c.l.b16 %v475
    %v1101 = vunpack.c.l.b16 %v476
    %v1102 = vunpack.c.l.b16 %v477
    %v1103 = vunpack.c.l.b16 %v478
    %v1104 = vunpack.c.l.b16 %v479
    %v1105 = vunpack.c.l.b16 %v480
    %v1106 = vunpack.c.l.b16 %v481
    %v1107 = vunpack.c.l.b16 %v482
    %v1108 = vunpack.c.l.b16 %v483
    %v1109 = vunpack.c.l.b16 %v484
    %v1110 = vunpack.c.l.b16 %v485
    %v1111 = vunpack.c.l.b16 %v486
    %v1112 = vunpack.c.l.b16 %v487
    %v1113 = vunpack.c.l.b16 %v488
    %v1114 = vunpack.c.l.b16 %v489
    %v1115 = vunpack.c.l.b16 %v490
    %v1116 = vunpack.c.l.b16 %v491
    %v1117 = vunpack.c.l.b16 %v492
    %v1118 = vunpack.c.l.b16 %v493
    %v1119 = vunpack.c.l.b16 %v494
    %v1120 = vunpack.c.l.b16 %v495
    %v1121 = vunpack.c.l.b16 %v496
    %v1122 = vunpack.c.l.b16 %v497
    %v1123 = vunpack.c.l.b16 %v498
    %v1124 = vunpack.c.l.b16 %v499
    %v1125 = vunpack.c.l.b16 %v500
    %v1126 = vunpack.c.l.b16 %v501
    %v1127 = vunpack.c.l.b16 %v502
    %v1128 = vunpack.c.l.b16 %v503
    %v1129 = vunpack.c.l.b16 %v504
    %v1130 = vunpack.c.l.b16 %v505
    %v1131 = vunpack.c.l.b16 %v506
    %v1132 = vunpack.c.l.b16 %v507
    %v1133 = vunpack.c.l.b16 %v508
    %v1134 = vunpack.c.l.b16 %v509
    %v1135 = vunpack.c.l.b16 %v510
    %v1136 = vunpack.c.l.b16 %v511
    %v1137 = vunpack.c.l.b16 %v512
    %v1138 = vunpack.c.l.b16 %v513
    %v1139 = vunpack.c.l.b16 %v514
    %v1140 = vunpack.c.l.b16 %v515
    %v1141 = vunpack.c.l.b16 %v516
    %v1142 = vunpack.c.l.b16 %v517
    %v1143 = vunpack.c.l.b16 %v518
    %v1144 = vunpack.c.l.b16 %v519
    %v1145 = vunpack.c.l.b16 %v520
    %v1146 = vunpack.c.l.b16 %v521
    %v1147 = vunpack.c.l.b16 %v522
    %v1148 = vunpack.c.l.b16 %v523
    %v1149 = vunpack.c.l.b16 %v524
    %v1150 = vunpack.c.l.b16 %v525
    %v1151 = vunpack.c.l.b16 %v526
    %v1152 = vunpack.c.l.b16 %v527
    %v1153 = vunpack.c.l.b16 %v528
    %v1154 = vunpack.c.l.b16 %v529
    %v1155 = vunpack.c.l.b16 %v530
    %v1156 = vunpack.c.l.b16 %v531
    %v1157 = vunpack.c.l.b16 %v532
    %v1158 = vunpack.c.l.b16 %v533
    %v1159 = vunpack.c.l.b16 %v534
    %v1160 = vunpack.c.l.b16 %v535
    %v1161 = vunpack.c.l.b16 %v536
    %v1162 = vunpack.c.l.b16 %v537
    %v1163 = vunpack.c.l.b16 %v538
    %v1164 = vunpack.c.l.b16 %v539
    %v1165 = vunpack.c.l.b16 %v540
    %v1166 = vunpack.c.l.b16 %v541
    %v1167 = vunpack.c.l.b16 %v542
    %v1168 = vunpack.c.l.b16 %v543
    %v1169 = vunpack.c.l.b16 %v544
    %v1170 = vunpack.c.l.b16 %v545
    %v1171 = vunpack.c.l.b16 %v546
    %v1172 = vunpack.c.l.b16 %v547
    %v1173 = vunpack.c.l.b16 %v548
    %v1174 = vunpack.c.l.b16 %v549
    %v1175 = vunpack.c.l.b16 %v550
    %v1176 = vunpack.c.l.b16 %v551
    %v1177 = vunpack.c.l.b16 %v552
    %v1178 = vunpack.c.l.b16 %v553
    %v1179 = vunpack.c.l.b16 %v554
    %v1180 = vunpack.c.l.b16 %v555
    %v1181 = vunpack.c.l.b16 %v556
    %v1182 = vunpack.c.l.b16 %v557
    %v1183 = vunpack.c.l.b16 %v558
    %v1184 = vunpack.c.l.b16 %v559
    %v1185 = vunpack.c.l.b16 %v560
    %v1186 = vunpack.c.l.b16 %v561
    %v1187 = vunpack.c.l.b16 %v562
    %v1188 = vunpack.c.l.b16 %v563
    %v1189 = vunpack.c.l.b16 %v564
    %v1190 = vunpack.c.l.b16 %v565
    %v1191 = vunpack.c.l.b16 %v566
    %v1192 = vunpack.c.l.b16 %v567
    %v1193 = vunpack.c.l.b16 %v568
    %v1194 = vunpack.c.l.b16 %v569
    %v1195 = vunpack.c.l.b16 %v570
    %v1196 = vunpack.c.l.b16 %v571
    %v1197 = vunpack.c.l.b16 %v572
    %v1198 = vunpack.c.l.b16 %v573
    %v1199 = vunpack.c.l.b16 %v574
    %v1200 = vunpack.c.l.b16 %v575
    %v1201 = vunpack.c.l.b16 %v576
    %v1202 = vunpack.c.l.b16 %v577
    %v1203 = vunpack.c.l.b16 %v578
    %v1204 = vunpack.c.l.b16 %v579
    %v1205 = vunpack.c.l.b16 %v580
    %v1206 = vunpack.c.l.b16 %v581
    %v1207 = vunpack.c.l.b16 %v582
    %v1208 = vunpack.c.l.b16 %v583
    %v1209 = vunpack.c.l.b16 %v584
    %v1210 = vunpack.c.l.b16 %v585
    %v1211 = vunpack.c.l.b16 %v586
    %v1212 = vunpack.c.l.b16 %v587
    %v1213 = vunpack.c.l.b16 %v588
    %v1214 = vunpack.c.l.b16 %v589
    %v1215 = vunpack.c.l.b16 %v590
    %v1216 = vunpack.c.l.b16 %v591
    %v1217 = vunpack.c.l.b16 %v592
    %v1218 = vunpack.c.l.b16 %v593
    %v1219 = vunpack.c.l.b16 %v594
    %v1220 = vunpack.c.l.b16 %v595
    %v1221 = vunpack.c.l.b16 %v596
    %v1222 = vunpack.c.l.b16 %v597
    %v1223 = vunpack.c.l.b16 %v598
    %v1224 = vunpack.c.l.b16 %v599
    %v1225 = vunpack.c.l.b16 %v600
    %v1226 = vunpack.c.l.b16 %v601
    %v1227 = vunpack.c.l.b16 %v602
    %v1228 = vunpack.c.l.b16 %v603
    %v1229 = vunpack.c.l.b16 %v604
    %v1230 = vunpack.c.l.b16 %v605
    %v1231 = vunpack.c.l.b16 %v606
    %v1232 = vunpack.c.l.b16 %v607
    %v1233 = vunpack.c.l.b16 %v608
    %v1234 = vunpack.c.l.b16 %v609
    %v1235 = vunpack.c.l.b16 %v610
    %v1236 = vunpack.c.l.b16 %v611
    %v1237 = vunpack.c.l.b16 %v612
    %v1238 = vunpack.c.l.b16 %v613
    %v1239 = vunpack.c.l.b16 %v614
    %v1240 = vunpack.c.l.b16 %v615
    %v1241 = vunpack.c.l.b16 %v616
    %v1242 = vunpack.c.l.b16 %v617
    %v1243 = vunpack.c.l.b16 %v618
    %v1244 = vunpack.c.l.b16 %v619
    %v1245 = vunpack.c.l.b16 %v620
    %v1246 = vunpack.c.l.b16 %v621
    %v1247 = vunpack.c.l.b16 %v622
    %v1248 = vunpack.c.l.b16 %v623
    %v1249 = vunpack.c.l.b16 %v624
    %v1250 = vunpack.c.l.b16 %v625
    %v1251 = vunpack.c.l.b16 %v626
    %v1252 = vunpack.c.l.b16 %v627
    %v1253 = vunpack.c.l.b16 %v628
    %v1254 = vunpack.c.l.b16 %v629
    %v1255 = vunpack.c.l.b16 %v630
    %v1256 = vunpack.c.l.b16 %v631
    %v1257 = vunpack.c.l.b16 %v632
    %v1258 = vunpack.c.l.b16 %v633
    %v1259 = vunpack.c.l.b16 %v634
    %v1260 = vunpack.c.l.b16 %v635
    %v1261 = vunpack.c.l.b16 %v636
    %v1262 = vunpack.c.l.b16 %v637
    %v1263 = vunpack.c.l.b16 %v638
    %v1264 = vunpack.c.l.b16 %v639
    %v1265 = vunpack.c.l.b16 %v640
    %v1266 = vunpack.c.l.b16 %v641
    %v1267 = vunpack.c.l.b16 %v642
    %v1268 = vunpack.c.l.b16 %v643
    %v1269 = vunpack.c.l.b16 %v644
    %v1270 = vunpack.c.l.b16 %v645
    %v1271 = vunpack.c.l.b16 %v646
    %v1272 = vunpack.c.l.b16 %v647
    %v1273 = vunpack.c.l.b16 %v648
    %v1274 = vunpack.c.l.b16 %v649
    %v1275 = vunpack.c.l.b16 %v650
    %v1276 = vunpack.c.l.b16 %v651
    %v1277 = vpack.c.b16 %v1022, %v1021
    %v1278 = vpack.c.b16 %v1024, %v1023
    %v1279 = vpack.c.b16 %v1026, %v1025
    %v1280 = vpack.c.b16 %v1028, %v1027
    %v1281 = vpack.c.b16 %v1030, %v1029
    %v1282 = vpack.c.b16 %v1032, %v1031
    %v1283 = vpack.c.b16 %v1034, %v1033
    %v1284 = vpack.c.b16 %v1036, %v1035
    %v1285 = vpack.c.b16 %v1038, %v1037
    %v1286 = vpack.c.b16 %v1040, %v1039
    %v1287 = vpack.c.b16 %v1042, %v1041
    %v1288 = vpack.c.b16 %v1044, %v1043
    %v1289 = vpack.c.b16 %v1046, %v1045
    %v1290 = vpack.c.b16 %v1048, %v1047
    %v1291 = vpack.c.b16 %v1050, %v1049
    %v1292 = vpack.c.b16 %v1052, %v1051
    %v1293 = vpack.c.b16 %v1054, %v1053
    %v1294 = vpack.c.b16 %v1056, %v1055
    %v1295 = vpack.c.b16 %v1058, %v1057
    %v1296 = vpack.c.b16 %v1060, %v1059
    %v1297 = vpack.c.b16 %v1062, %v1061
    %v1298 = vpack.c.b16 %v1064, %v1063
    %v1299 = vpack.c.b16 %v1066, %v1065
    %v1300 = vpack.c.b16 %v1068, %v1067
    %v1301 = vpack.c.b16 %v1070, %v1069
    %v1302 = vpack.c.b16 %v1072, %v1071
    %v1303 = vpack.c.b16 %v1074, %v1073
    %v1304 = vpack.c.b16 %v1076, %v1075
    %v1305 = vpack.c.b16 %v1078, %v1077
    %v1306 = vpack.c.b16 %v1080, %v1079
    %v1307 = vpack.c.b16 %v1082, %v1081
    %v1308 = vpack.c.b16 %v1084, %v1083
    %v1309 = vpack.c.b16 %v1086, %v1085
    %v1310 = vpack.c.b16 %v1088, %v1087
    %v1311 = vpack.c.b16 %v1090, %v1089
    %v1312 = vpack.c.b16 %v1092, %v1091
    %v1313 = vpack.c.b16 %v1094, %v1093
    %v1314 = vpack.c.b16 %v1096, %v1095
    %v1315 = vpack.c.b16 %v1098, %v1097
    %v1316 = vpack.c.b16 %v1100, %v1099
    %v1317 = vpack.c.b16 %v1102, %v1101
    %v1318 = vpack.c.b16 %v1104, %v1103
    %v1319 = vpack.c.b16 %v1106, %v1105
    %v1320 = vpack.c.b16 %v1108, %v1107
    %v1321 = vpack.c.b16 %v1110, %v1109
    %v1322 = vpack.c.b16 %v1112, %v1111
    %v1323 = vpack.c.b16 %v1114, %v1113
    %v1324 = vpack.c.b16 %v1116, %v1115
    %v1325 = vpack.c.b16 %v1118, %v1117
    %v1326 = vpack.c.b16 %v1120, %v1119
    %v1327 = vpack.c.b16 %v1122, %v1121
    %v1328 = vpack.c.b16 %v1124, %v1123
    %v1329 = vpack.c.b16 %v1126, %v1125
    %v1330 = vpack.c.b16 %v1128, %v1127
    %v1331 = vpack.c.b16 %v1130, %v1129
    %v1332 = vpack.c.b16 %v1132, %v1131
    %v1333 = vpack.c.b16 %v1134, %v1133
    %v1334 = vpack.c.b16 %v1136, %v1135
    %v1335 = vpack.c.b16 %v1138, %v1137
    %v1336 = vpack.c.b16 %v1140, %v1139
    %v1337 = vpack.c.b16 %v1142, %v1141
    %v1338 = vpack.c.b16 %v1144, %v1143
    %v1339 = vpack.c.b16 %v1146, %v1145
    %v1340 = vpack.c.b16 %v1148, %v1147
    %v1341 = vpack.c.b16 %v1150, %v1149
    %v1342 = vpack.c.b16 %v1152, %v1151
    %v1343 = vpack.c.b16 %v1154, %v1153
    %v1344 = vpack.c.b16 %v1156, %v1155
    %v1345 = vpack.c.b16 %v1158, %v1157
    %v1346 = vpack.c.b16 %v1160, %v1159
    %v1347 = vpack.c.b16 %v1162, %v1161
    %v1348 = vpack.c.b16 %v1164, %v1163
    %v1349 = vpack.c.b16 %v1166, %v1165
    %v1350 = vpack.c.b16 %v1168, %v1167
    %v1351 = vpack.c.b16 %v1170, %v1169
    %v1352 = vpack.c.b16 %v1172, %v1171
    %v1353 = vpack.c.b16 %v1174, %v1173
    %v1354 = vpack.c.b16 %v1176, %v1175
    %v1355 = vpack.c.b16 %v1178, %v1177
    %v1356 = vpack.c.b16 %v1180, %v1179
    %v1357 = vpack.c.b16 %v1182, %v1181
    %v1358 = vpack.c.b16 %v1184, %v1183
    %v1359 = vpack.c.b16 %v1186, %v1185
    %v1360 = vpack.c.b16 %v1188, %v1187
    %v1361 = vpack.c.b16 %v1190, %v1189
    %v1362 = vpack.c.b16 %v1192, %v1191
    %v1363 = vpack.c.b16 %v1194, %v1193
    %v1364 = vpack.c.b16 %v1196, %v1195
    %v1365 = vpack.c.b16 %v1198, %v1197
    %v1366 = vpack.c.b16 %v1200, %v1199
    %v1367 = vpack.c.b16 %v1202, %v1201
    %v1368 = vpack.c.b16 %v1204, %v1203
    %v1369 = vpack.c.b16 %v1206, %v1205
    %v1370 = vpack.c.b16 %v1208, %v1207
    %v1371 = vpack.c.b16 %v1210, %v1209
    %v1372 = vpack.c.b16 %v1212, %v1211
    %v1373 = vpack.c.b16 %v1214, %v1213
    %v1374 = vpack.c.b16 %v1216, %v1215
    %v1375 = vpack.c.b16 %v1218, %v1217
    %v1376 = vpack.c.b16 %v1220, %v1219
    %v1377 = vpack.c.b16 %v1222, %v1221
    %v1378 = vpack.c.b16 %v1224, %v1223
    %v1379 = vpack.c.b16 %v1226, %v1225
    %v1380 = vpack.c.b16 %v1228, %v1227
    %v1381 = vpack.c.b16 %v1230, %v1229
    %v1382 = vpack.c.b16 %v1232, %v1231
    %v1383 = vpack.c.b16 %v1234, %v1233
    %v1384 = vpack.c.b16 %v1236, %v1235
    %v1385 = vpack.c.b16 %v1238, %v1237
    %v1386 = vpack.c.b16 %v1240, %v1239
    %v1387 = vpack.c.b16 %v1242, %v1241
    %v1388 = vpack.c.b16 %v1244, %v1243
    %v1389 = vpack.c.b16 %v1246, %v1245
    %v1390 = vpack.c.b16 %v1248, %v1247
    %v1391 = vpack.c.b16 %v1250, %v1249
    %v1392 = vpack.c.b16 %v1252, %v1251
    %v1393 = vpack.c.b16 %v1254, %v1253
    %v1394 = vpack.c.b16 %v1256, %v1255
    %v1395 = vpack.c.b16 %v1258, %v1257
    %v1396 = vpack.c.b16 %v1260, %v1259
    %v1397 = vpack.c.b16 %v1262, %v1261
    %v1398 = vpack.c.b16 %v1264, %v1263
    %v1399 = vpack.c.b16 %v1266, %v1265
    %v1400 = vpack.c.b16 %v1268, %v1267
    %v1401 = vpack.c.b16 %v1270, %v1269
    %v1402 = vpack.c.b16 %v1272, %v1271
    %v1403 = vpack.c.b16 %v1274, %v1273
    %v1404 = vpack.c.b16 %v1276, %v1275
    %1533 = vmatprep.subr.bf16.mxu0 0
    %1534 = vmatpush1.bf16.msra.mxu0 %v1277
    %1535 = vmatprep.subr.bf16.mxu0 0
    %1536 = vmatpush1.bf16.msra.mxu0 %v1278
    %1537 = vmatprep.subr.bf16.mxu0 0
    %1538 = vmatpush1.bf16.msra.mxu0 %v1279
    %1539 = vmatprep.subr.bf16.mxu0 0
    %1540 = vmatpush1.bf16.msra.mxu0 %v1280
    %1541 = vmatprep.subr.bf16.mxu0 0
    %1542 = vmatpush1.bf16.msra.mxu0 %v1281
    %1543 = vmatprep.subr.bf16.mxu0 0
    %1544 = vmatpush1.bf16.msra.mxu0 %v1282
    %1545 = vmatprep.subr.bf16.mxu0 0
    %1546 = vmatpush1.bf16.msra.mxu0 %v1283
    %1547 = vmatprep.subr.bf16.mxu0 0
    %1548 = vmatpush1.bf16.msra.mxu0 %v1284
    %1549 = vmatprep.subr.bf16.mxu0 0
    %1550 = vmatpush1.bf16.msra.mxu0 %v1285
    %1551 = vmatprep.subr.bf16.mxu0 0
    %1552 = vmatpush1.bf16.msra.mxu0 %v1286
    %1553 = vmatprep.subr.bf16.mxu0 0
    %1554 = vmatpush1.bf16.msra.mxu0 %v1287
    %1555 = vmatprep.subr.bf16.mxu0 0
    %1556 = vmatpush1.bf16.msra.mxu0 %v1288
    %1557 = vmatprep.subr.bf16.mxu0 0
    %1558 = vmatpush1.bf16.msra.mxu0 %v1289
    %1559 = vmatprep.subr.bf16.mxu0 0
    %1560 = vmatpush1.bf16.msra.mxu0 %v1290
    %1561 = vmatprep.subr.bf16.mxu0 0
    %1562 = vmatpush1.bf16.msra.mxu0 %v1291
    %1563 = vmatprep.subr.bf16.mxu0 0
    %1564 = vmatpush1.bf16.msra.mxu0 %v1292
    %1565 = vmatprep.mubr.bf16.mxu0 %v734
    %1566 = vmatmul.mubr.bf16.gmra.mrb[0].mxu0 %v733
    %v1567 = vpop.f32.mrb[0].mxu0
    %v1568 = vadd.f32 0.0, %v1567
    %v1569 = vpop.f32.mrb[0].mxu0
    %v1570 = vpop.f32.mrb[0].mxu0
    %v1571 = vpop.f32.mrb[0].mxu0
    %1572 = vdwg.mxu0
    %1573 = vmatprep.subr.bf16.mxu0 0
    %1574 = vmatpush1.bf16.msra.mxu0 %v1293
    %1575 = vmatprep.subr.bf16.mxu0 0
    %1576 = vmatpush1.bf16.msra.mxu0 %v1294
    %1577 = vmatprep.subr.bf16.mxu0 0
    %1578 = vmatpush1.bf16.msra.mxu0 %v1295
    %1579 = vmatprep.subr.bf16.mxu0 0
    %1580 = vmatpush1.bf16.msra.mxu0 %v1296
    %1581 = vmatprep.subr.bf16.mxu0 0
    %1582 = vmatpush1.bf16.msra.mxu0 %v1297
    %1583 = vmatprep.subr.bf16.mxu0 0
    %1584 = vmatpush1.bf16.msra.mxu0 %v1298
    %1585 = vmatprep.subr.bf16.mxu0 0
    %1586 = vmatpush1.bf16.msra.mxu0 %v1299
    %1587 = vmatprep.subr.bf16.mxu0 0
    %1588 = vmatpush1.bf16.msra.mxu0 %v1300
    %1589 = vmatprep.subr.bf16.mxu0 0
    %1590 = vmatpush1.bf16.msra.mxu0 %v1301
    %1591 = vmatprep.subr.bf16.mxu0 0
    %1592 = vmatpush1.bf16.msra.mxu0 %v1302
    %1593 = vmatprep.subr.bf16.mxu0 0
    %1594 = vmatpush1.bf16.msra.mxu0 %v1303
    %1595 = vmatprep.subr.bf16.mxu0 0
    %1596 = vmatpush1.bf16.msra.mxu0 %v1304
    %1597 = vmatprep.subr.bf16.mxu0 0
    %1598 = vmatpush1.bf16.msra.mxu0 %v1305
    %1599 = vmatprep.subr.bf16.mxu0 0
    %1600 = vmatpush1.bf16.msra.mxu0 %v1306
    %1601 = vmatprep.subr.bf16.mxu0 0
    %1602 = vmatpush1.bf16.msra.mxu0 %v1307
    %1603 = vmatprep.subr.bf16.mxu0 0
    %1604 = vmatpush1.bf16.msra.mxu0 %v1308
    %1605 = vmatprep.mubr.bf16.mxu0 %v736
    %1606 = vmatmul.mubr.bf16.gmra.mrb[0].mxu0 %v735
    %v1607 = vpop.f32.mrb[0].mxu0
    %v1608 = vadd.f32 %v1568, %v1607
    %v1609 = vpop.f32.mrb[0].mxu0
    %v1610 = vpop.f32.mrb[0].mxu0
    %v1611 = vpop.f32.mrb[0].mxu0
    %1612 = vdwg.mxu0
    %1613 = vmatprep.subr.bf16.mxu0 0
    %1614 = vmatpush1.bf16.msra.mxu0 %v1309
    %1615 = vmatprep.subr.bf16.mxu0 0
    %1616 = vmatpush1.bf16.msra.mxu0 %v1310
    %1617 = vmatprep.subr.bf16.mxu0 0
    %1618 = vmatpush1.bf16.msra.mxu0 %v1311
    %1619 = vmatprep.subr.bf16.mxu0 0
    %1620 = vmatpush1.bf16.msra.mxu0 %v1312
    %1621 = vmatprep.subr.bf16.mxu0 0
    %1622 = vmatpush1.bf16.msra.mxu0 %v1313
    %1623 = vmatprep.subr.bf16.mxu0 0
    %1624 = vmatpush1.bf16.msra.mxu0 %v1314
    %1625 = vmatprep.subr.bf16.mxu0 0
    %1626 = vmatpush1.bf16.msra.mxu0 %v1315
    %1627 = vmatprep.subr.bf16.mxu0 0
    %1628 = vmatpush1.bf16.msra.mxu0 %v1316
    %1629 = vmatprep.subr.bf16.mxu0 0
    %1630 = vmatpush1.bf16.msra.mxu0 %v1317
    %1631 = vmatprep.subr.bf16.mxu0 0
    %1632 = vmatpush1.bf16.msra.mxu0 %v1318
    %1633 = vmatprep.subr.bf16.mxu0 0
    %1634 = vmatpush1.bf16.msra.mxu0 %v1319
    %1635 = vmatprep.subr.bf16.mxu0 0
    %1636 = vmatpush1.bf16.msra.mxu0 %v1320
    %1637 = vmatprep.subr.bf16.mxu0 0
    %1638 = vmatpush1.bf16.msra.mxu0 %v1321
    %1639 = vmatprep.subr.bf16.mxu0 0
    %1640 = vmatpush1.bf16.msra.mxu0 %v1322
    %1641 = vmatprep.subr.bf16.mxu0 0
    %1642 = vmatpush1.bf16.msra.mxu0 %v1323
    %1643 = vmatprep.subr.bf16.mxu0 0
    %1644 = vmatpush1.bf16.msra.mxu0 %v1324
    %1645 = vmatprep.mubr.bf16.mxu0 %v738
    %1646 = vmatmul.mubr.bf16.gmra.mrb[0].mxu0 %v737
    %v1647 = vpop.f32.mrb[0].mxu0
    %v1648 = vadd.f32 %v1608, %v1647
    %v1649 = vpop.f32.mrb[0].mxu0
    %v1650 = vpop.f32.mrb[0].mxu0
    %v1651 = vpop.f32.mrb[0].mxu0
    %1652 = vdwg.mxu0
    %1653 = vmatprep.subr.bf16.mxu0 0
    %1654 = vmatpush1.bf16.msra.mxu0 %v1325
    %1655 = vmatprep.subr.bf16.mxu0 0
    %1656 = vmatpush1.bf16.msra.mxu0 %v1326
    %1657 = vmatprep.subr.bf16.mxu0 0
    %1658 = vmatpush1.bf16.msra.mxu0 %v1327
    %1659 = vmatprep.subr.bf16.mxu0 0
    %1660 = vmatpush1.bf16.msra.mxu0 %v1328
    %1661 = vmatprep.subr.bf16.mxu0 0
    %1662 = vmatpush1.bf16.msra.mxu0 %v1329
    %1663 = vmatprep.subr.bf16.mxu0 0
    %1664 = vmatpush1.bf16.msra.mxu0 %v1330
    %1665 = vmatprep.subr.bf16.mxu0 0
    %1666 = vmatpush1.bf16.msra.mxu0 %v1331
    %1667 = vmatprep.subr.bf16.mxu0 0
    %1668 = vmatpush1.bf16.msra.mxu0 %v1332
    %1669 = vmatprep.subr.bf16.mxu0 0
    %1670 = vmatpush1.bf16.msra.mxu0 %v1333
    %1671 = vmatprep.subr.bf16.mxu0 0
    %1672 = vmatpush1.bf16.msra.mxu0 %v1334
    %1673 = vmatprep.subr.bf16.mxu0 0
    %1674 = vmatpush1.bf16.msra.mxu0 %v1335
    %1675 = vmatprep.subr.bf16.mxu0 0
    %1676 = vmatpush1.bf16.msra.mxu0 %v1336
    %1677 = vmatprep.subr.bf16.mxu0 0
    %1678 = vmatpush1.bf16.msra.mxu0 %v1337
    %1679 = vmatprep.subr.bf16.mxu0 0
    %1680 = vmatpush1.bf16.msra.mxu0 %v1338
    %1681 = vmatprep.subr.bf16.mxu0 0
    %1682 = vmatpush1.bf16.msra.mxu0 %v1339
    %1683 = vmatprep.subr.bf16.mxu0 0
    %1684 = vmatpush1.bf16.msra.mxu0 %v1340
    %1685 = vmatprep.mubr.bf16.mxu0 %v740
    %1686 = vmatmul.mubr.bf16.gmra.mrb[0].mxu0 %v739
    %v1687 = vpop.f32.mrb[0].mxu0
    %v1688 = vadd.f32 %v1648, %v1687
    %v1689 = vpop.f32.mrb[0].mxu0
    %v1690 = vpop.f32.mrb[0].mxu0
    %v1691 = vpop.f32.mrb[0].mxu0
    %1692 = vdwg.mxu0
    %1693 = vmatprep.subr.bf16.mxu0 0
    %1694 = vmatpush1.bf16.msra.mxu0 %v1341
    %1695 = vmatprep.subr.bf16.mxu0 0
    %1696 = vmatpush1.bf16.msra.mxu0 %v1342
    %1697 = vmatprep.subr.bf16.mxu0 0
    %1698 = vmatpush1.bf16.msra.mxu0 %v1343
    %1699 = vmatprep.subr.bf16.mxu0 0
    %1700 = vmatpush1.bf16.msra.mxu0 %v1344
    %1701 = vmatprep.subr.bf16.mxu0 0
    %1702 = vmatpush1.bf16.msra.mxu0 %v1345
    %1703 = vmatprep.subr.bf16.mxu0 0
    %1704 = vmatpush1.bf16.msra.mxu0 %v1346
    %1705 = vmatprep.subr.bf16.mxu0 0
    %1706 = vmatpush1.bf16.msra.mxu0 %v1347
    %1707 = vmatprep.subr.bf16.mxu0 0
    %1708 = vmatpush1.bf16.msra.mxu0 %v1348
    %1709 = vmatprep.subr.bf16.mxu0 0
    %1710 = vmatpush1.bf16.msra.mxu0 %v1349
    %1711 = vmatprep.subr.bf16.mxu0 0
    %1712 = vmatpush1.bf16.msra.mxu0 %v1350
    %1713 = vmatprep.subr.bf16.mxu0 0
    %1714 = vmatpush1.bf16.msra.mxu0 %v1351
    %1715 = vmatprep.subr.bf16.mxu0 0
    %1716 = vmatpush1.bf16.msra.mxu0 %v1352
    %1717 = vmatprep.subr.bf16.mxu0 0
    %1718 = vmatpush1.bf16.msra.mxu0 %v1353
    %1719 = vmatprep.subr.bf16.mxu0 0
    %1720 = vmatpush1.bf16.msra.mxu0 %v1354
    %1721 = vmatprep.subr.bf16.mxu0 0
    %1722 = vmatpush1.bf16.msra.mxu0 %v1355
    %1723 = vmatprep.subr.bf16.mxu0 0
    %1724 = vmatpush1.bf16.msra.mxu0 %v1356
    %1725 = vmatprep.mubr.bf16.mxu0 %v742
    %1726 = vmatmul.mubr.bf16.gmra.mrb[0].mxu0 %v741
    %v1727 = vpop.f32.mrb[0].mxu0
    %v1728 = vadd.f32 %v1688, %v1727
    %v1729 = vpop.f32.mrb[0].mxu0
    %v1730 = vpop.f32.mrb[0].mxu0
    %v1731 = vpop.f32.mrb[0].mxu0
    %1732 = vdwg.mxu0
    %1733 = vmatprep.subr.bf16.mxu0 0
    %1734 = vmatpush1.bf16.msra.mxu0 %v1357
    %1735 = vmatprep.subr.bf16.mxu0 0
    %1736 = vmatpush1.bf16.msra.mxu0 %v1358
    %1737 = vmatprep.subr.bf16.mxu0 0
    %1738 = vmatpush1.bf16.msra.mxu0 %v1359
    %1739 = vmatprep.subr.bf16.mxu0 0
    %1740 = vmatpush1.bf16.msra.mxu0 %v1360
    %1741 = vmatprep.subr.bf16.mxu0 0
    %1742 = vmatpush1.bf16.msra.mxu0 %v1361
    %1743 = vmatprep.subr.bf16.mxu0 0
    %1744 = vmatpush1.bf16.msra.mxu0 %v1362
    %1745 = vmatprep.subr.bf16.mxu0 0
    %1746 = vmatpush1.bf16.msra.mxu0 %v1363
    %1747 = vmatprep.subr.bf16.mxu0 0
    %1748 = vmatpush1.bf16.msra.mxu0 %v1364
    %1749 = vmatprep.subr.bf16.mxu0 0
    %1750 = vmatpush1.bf16.msra.mxu0 %v1365
    %1751 = vmatprep.subr.bf16.mxu0 0
    %1752 = vmatpush1.bf16.msra.mxu0 %v1366
    %1753 = vmatprep.subr.bf16.mxu0 0
    %1754 = vmatpush1.bf16.msra.mxu0 %v1367
    %1755 = vmatprep.subr.bf16.mxu0 0
    %1756 = vmatpush1.bf16.msra.mxu0 %v1368
    %1757 = vmatprep.subr.bf16.mxu0 0
    %1758 = vmatpush1.bf16.msra.mxu0 %v1369
    %1759 = vmatprep.subr.bf16.mxu0 0
    %1760 = vmatpush1.bf16.msra.mxu0 %v1370
    %1761 = vmatprep.subr.bf16.mxu0 0
    %1762 = vmatpush1.bf16.msra.mxu0 %v1371
    %1763 = vmatprep.subr.bf16.mxu0 0
    %1764 = vmatpush1.bf16.msra.mxu0 %v1372
    %1765 = vmatprep.mubr.bf16.mxu0 %v744
    %1766 = vmatmul.mubr.bf16.gmra.mrb[0].mxu0 %v743
    %v1767 = vpop.f32.mrb[0].mxu0
    %v1768 = vadd.f32 %v1728, %v1767
    %v1769 = vpop.f32.mrb[0].mxu0
    %v1770 = vpop.f32.mrb[0].mxu0
    %v1771 = vpop.f32.mrb[0].mxu0
    %1772 = vdwg.mxu0
    %1773 = vmatprep.subr.bf16.mxu0 0
    %1774 = vmatpush1.bf16.msra.mxu0 %v1373
    %1775 = vmatprep.subr.bf16.mxu0 0
    %1776 = vmatpush1.bf16.msra.mxu0 %v1374
    %1777 = vmatprep.subr.bf16.mxu0 0
    %1778 = vmatpush1.bf16.msra.mxu0 %v1375
    %1779 = vmatprep.subr.bf16.mxu0 0
    %1780 = vmatpush1.bf16.msra.mxu0 %v1376
    %1781 = vmatprep.subr.bf16.mxu0 0
    %1782 = vmatpush1.bf16.msra.mxu0 %v1377
    %1783 = vmatprep.subr.bf16.mxu0 0
    %1784 = vmatpush1.bf16.msra.mxu0 %v1378
    %1785 = vmatprep.subr.bf16.mxu0 0
    %1786 = vmatpush1.bf16.msra.mxu0 %v1379
    %1787 = vmatprep.subr.bf16.mxu0 0
    %1788 = vmatpush1.bf16.msra.mxu0 %v1380
    %1789 = vmatprep.subr.bf16.mxu0 0
    %1790 = vmatpush1.bf16.msra.mxu0 %v1381
    %1791 = vmatprep.subr.bf16.mxu0 0
    %1792 = vmatpush1.bf16.msra.mxu0 %v1382
    %1793 = vmatprep.subr.bf16.mxu0 0
    %1794 = vmatpush1.bf16.msra.mxu0 %v1383
    %1795 = vmatprep.subr.bf16.mxu0 0
    %1796 = vmatpush1.bf16.msra.mxu0 %v1384
    %1797 = vmatprep.subr.bf16.mxu0 0
    %1798 = vmatpush1.bf16.msra.mxu0 %v1385
    %1799 = vmatprep.subr.bf16.mxu0 0
    %1800 = vmatpush1.bf16.msra.mxu0 %v1386
    %1801 = vmatprep.subr.bf16.mxu0 0
    %1802 = vmatpush1.bf16.msra.mxu0 %v1387
    %1803 = vmatprep.subr.bf16.mxu0 0
    %1804 = vmatpush1.bf16.msra.mxu0 %v1388
    %1805 = vmatprep.mubr.bf16.mxu0 %v746
    %1806 = vmatmul.mubr.bf16.gmra.mrb[0].mxu0 %v745
    %v1807 = vpop.f32.mrb[0].mxu0
    %v1808 = vadd.f32 %v1768, %v1807
    %v1809 = vpop.f32.mrb[0].mxu0
    %v1810 = vpop.f32.mrb[0].mxu0
    %v1811 = vpop.f32.mrb[0].mxu0
    %1812 = vdwg.mxu0
    %1813 = vmatprep.subr.bf16.mxu0 0
    %1814 = vmatpush1.bf16.msra.mxu0 %v1389
    %1815 = vmatprep.subr.bf16.mxu0 0
    %1816 = vmatpush1.bf16.msra.mxu0 %v1390
    %1817 = vmatprep.subr.bf16.mxu0 0
    %1818 = vmatpush1.bf16.msra.mxu0 %v1391
    %1819 = vmatprep.subr.bf16.mxu0 0
    %1820 = vmatpush1.bf16.msra.mxu0 %v1392
    %1821 = vmatprep.subr.bf16.mxu0 0
    %1822 = vmatpush1.bf16.msra.mxu0 %v1393
    %1823 = vmatprep.subr.bf16.mxu0 0
    %1824 = vmatpush1.bf16.msra.mxu0 %v1394
    %1825 = vmatprep.subr.bf16.mxu0 0
    %1826 = vmatpush1.bf16.msra.mxu0 %v1395
    %1827 = vmatprep.subr.bf16.mxu0 0
    %1828 = vmatpush1.bf16.msra.mxu0 %v1396
    %1829 = vmatprep.subr.bf16.mxu0 0
    %1830 = vmatpush1.bf16.msra.mxu0 %v1397
    %1831 = vmatprep.subr.bf16.mxu0 0
    %1832 = vmatpush1.bf16.msra.mxu0 %v1398
    %1833 = vmatprep.subr.bf16.mxu0 0
    %1834 = vmatpush1.bf16.msra.mxu0 %v1399
    %1835 = vmatprep.subr.bf16.mxu0 0
    %1836 = vmatpush1.bf16.msra.mxu0 %v1400
    %1837 = vmatprep.subr.bf16.mxu0 0
    %1838 = vmatpush1.bf16.msra.mxu0 %v1401
    %1839 = vmatprep.subr.bf16.mxu0 0
    %1840 = vmatpush1.bf16.msra.mxu0 %v1402
    %1841 = vmatprep.subr.bf16.mxu0 0
    %1842 = vmatpush1.bf16.msra.mxu0 %v1403
    %1843 = vmatprep.subr.bf16.mxu0 0
    %1844 = vmatpush1.bf16.msra.mxu0 %v1404
    %1845 = vmatprep.mubr.bf16.mxu0 %v748
    %1846 = vmatmul.mubr.bf16.gmra.mrb[0].mxu0 %v747
    %v1847 = vpop.f32.mrb[0].mxu0
    %v1848 = vadd.f32 %v1808, %v1847
    %v1849 = vpop.f32.mrb[0].mxu0
    %v1850 = vpop.f32.mrb[0].mxu0
    %v1851 = vpop.f32.mrb[0].mxu0
    %1852 = vdwg.mxu0
    %v1853 = vmul.f32 %v1848, 0.0625
    %v1854 = vld [vmem:[%s2] sm:$0x1]
    %v1856 = vlaneseq
    %v1857 = vshrl.u32 %v1856, 7
    %v1858 = vsub.s32 0, %v1857
    %v1859 = vrot.slane %v1854, %v1858
    %v1861 = vadd.f32 %v1853, %v1859
    %1862 = vst [vmem:[#allocation7] sm:$0x3] %v1861
    // Predicated region
    $region22: #{tpu_custom_call.1} parent=1 // pred_check
      _
    $region23: #{tpu_custom_call.1} parent=1 // pred_check_branch
      %1864 = sbr.rel (0) target = $region25
    $region24: #{tpu_custom_call.1} parent=1 // pred_region
      %s1866 = ssub.s32 32, 32
      %1867 = vsyncadd [#allocation4], %s1866
      %s1869 = sshll.u32 [#allocation7], 4
      %s1870 = int_to_ptr.vmem [resolvable:$true] %s1869
      %1872 = dma.vmem_to_hbm [thread:$0]  %s1870, 32, %s3, [#allocation4]
    $region25: #{tpu_custom_call.1} parent=1 // pred_fallthru
      _
    // Predicated region
    $region26: #{tpu_custom_call.1} parent=1 // pred_check
      _
    $region27: #{tpu_custom_call.1} parent=1 // pred_check_branch
      %1874 = sbr.rel (0) target = $region29
    $region28: #{tpu_custom_call.1} parent=1 // pred_region
      %1875 = dma.done [#allocation4], 32
    $region29: #{tpu_custom_call.1} parent=1 // pred_fallthru
      _
    %1876 = vsyncpa [#allocation3], 1
    %1877 = vsyncpa [#allocation6], 1
    %1878 = vsyncpa [#allocation4], 1

</llo_original>
